<compile_context>
chip_gen: v7x
topology: tpu7x:2x2x1
jax: 0.10.0
libtpu: 0.0.40
codegen_flags: <defaults>
</compile_context>

<pallas_src>
import jax
import jax.numpy as jnp
from jax import lax
from jax.experimental import pallas as pl
from jax.experimental.pallas import tpu as pltpu


def _elu(v):
    # ELU, alpha = 1.0 (PyTorch default); forward-only so exp on the positive
    # branch is harmless.
    return jnp.where(v > 0, v, jnp.exp(v) - 1.0)


def _make_kernel(Bt, H, W):
    """Kernel closure over the static geometry (Bt images per grid step)."""
    P = H * W
    N = Bt * P                 # lane extent of the activation slab
    Wp = W - 4
    # flat lane offsets of the 9 taps of a 3x3 window (dh major, dw minor)
    offsets = tuple(dh * W + dw for dh in range(3) for dw in range(3))

    def kernel(x_ref, w1_ref, b1_ref, w2_ref, b2_ref, w3_ref, b3_ref,
               avg_ref, o_ref):
        x = x_ref[...]                                   # [3, N]
        w1 = w1_ref[...]                                 # [16, 3]

        # ---- conv1 (1x1, 3->16): explicit 3-term FMA on the VPU
        y = (w1[:, 0:1] * x[0:1, :]
             + w1[:, 1:2] * x[1:2, :]
             + w1[:, 2:3] * x[2:3, :])                   # [16, N]
        y = _elu(y + b1_ref[...])                        # bias [16,1] broadcasts

        def conv3x3(act, w_ref, b_ref):
            # act: [Cin, N]; w_ref: [9, Cout, Cin].  9 accumulated tap matmuls,
            # operands built with lane rolls (no scratch, no im2col copy).
            w = w_ref[...]                               # [9, Cout, Cin]
            z = lax.dot_general(w[0], act,               # tap (0,0): no roll
                                (((1,), (0,)), ((), ())),
                                preferred_element_type=jnp.float32)
            for k in range(1, 9):
                piece = pltpu.roll(act, N - offsets[k], axis=1)
                z = z + lax.dot_general(w[k], piece,
                                        (((1,), (0,)), ((), ())),
                                        preferred_element_type=jnp.float32)
            return _elu(z + b_ref[...])

        y = conv3x3(y, w2_ref, b2_ref)                   # [16, N]
        y = conv3x3(y, w3_ref, b3_ref)                   # [32, N]

        # ---- mean over valid H rows + W crop, per image, as one small matmul;
        #      then log-softmax over the channel (sublane) axis.
        avg = avg_ref[...]                               # [P, Wp]
        for b in range(Bt):                              # Bt is static
            yb = y[:, b * P:(b + 1) * P]                 # [32, P], lane-aligned
            m = lax.dot_general(yb, avg,
                                (((1,), (0,)), ((), ())),
                                preferred_element_type=jnp.float32)  # [32, Wp]
            mx = jnp.max(m, axis=0, keepdims=True)
            sh = m - mx
            lse = jnp.log(jnp.sum(jnp.exp(sh), axis=0, keepdims=True))
            o_ref[b] = sh - lse

    return kernel


def prepare_params(params, H, W):
    """Host-side, per-parameter-set preprocessing (run once, reuse per call)."""
    w1, b1, w2, b2, w3, b3 = params
    P, Hv, Wp = H * W, H - 4, W - 4
    w1k = jnp.asarray(w1, jnp.float32).T                       # [16, 3]
    b1k = jnp.asarray(b1, jnp.float32).reshape(16, 1)
    w2k = jnp.transpose(jnp.asarray(w2, jnp.float32),
                        (0, 1, 3, 2)).reshape(9, 16, 16)       # [tap, out, in]
    b2k = jnp.asarray(b2, jnp.float32).reshape(16, 1)
    w3k = jnp.transpose(jnp.asarray(w3, jnp.float32),
                        (0, 1, 3, 2)).reshape(9, 32, 16)       # [tap, out, in]
    b3k = jnp.asarray(b3, jnp.float32).reshape(32, 1)
    # averaging matrix: picks column w' (< W-4) and averages the H-4 valid rows
    pp = jnp.arange(P)
    col = (pp % W)[:, None] == jnp.arange(Wp)[None, :]
    row_ok = (pp // W)[:, None] < Hv
    avg = (col & row_ok).astype(jnp.float32) / float(Hv)       # [P, Wp]
    return (w1k, b1k, w2k, b2k, w3k, b3k, avg)


def minimal_model_forward(x_nchw, prepped):
    """x_nchw: [B, 3, H, W] float32.  Returns [B, 32, W-4] (PyTorch order)."""
    w1k, b1k, w2k, b2k, w3k, b3k, avg = prepped
    B, C, H, W = x_nchw.shape
    assert C == 3 and H >= 5 and W >= 5
    P = H * W
    Wp = W - 4

    # ---- Bt selection: keep >= 2 grid steps when B >= 2 (both v7x TCs get
    #      work and the pipeline overlaps next-step DMA), amortize per-step
    #      overhead for large B, and respect an explicit VMEM budget.
    bytes_per_image = 4 * P * 140                 # blocks + live f32 temps (rough)
    budget = 24 << 20
    cap = min(B, 64, max(1, budget // bytes_per_image))
    if B >= 2:
        cap = min(cap, max(1, B // 2))            # ensure >= 2 parallel steps
    Bt = 1
    for cand in range(cap, 0, -1):
        if B % cand == 0:
            Bt = cand
            break
    if P % 128 != 0:
        Bt = B                                    # lane blocks must be 128-aligned
    grid = (B // Bt,)
    N = Bt * P

    # input as a [3, B*P] slab: channels on sublanes, images concatenated on lanes
    x2d = jnp.transpose(x_nchw.reshape(B, 3, P), (1, 0, 2)).reshape(3, B * P)

    kernel = _make_kernel(Bt, H, W)

    vmem_need = 4 * (2 * 3 * N                    # double-buffered input block
                     + 2 * 32 * Bt * Wp           # double-buffered output block
                     + 140 * N                    # live activation temps (generous)
                     + 9 * 16 * 16 + 9 * 32 * 16 + P * Wp + 256)
    vmem_limit = int(min(max(2 * vmem_need, 8 << 20), 40 << 20))

    flops = 2 * B * P * (3 * 16 + 144 * 16 + 144 * 32) + 2 * B * 32 * P * Wp
    trans = B * P * (16 + 16 + 32) + B * 33 * Wp
    bytes_acc = 4 * (B * 3 * P + B * 32 * Wp
                     + w1k.size + w2k.size + w3k.size
                     + b1k.size + b2k.size + b3k.size + P * Wp)

    out = pl.pallas_call(
        kernel,
        out_shape=jax.ShapeDtypeStruct((B, 32, Wp), jnp.float32),
        grid=grid,
        in_specs=[
            pl.BlockSpec((3, N), lambda i: (0, i)),           # x slab
            pl.BlockSpec((16, 3), lambda i: (0, 0)),          # w1 [out, in]
            pl.BlockSpec((16, 1), lambda i: (0, 0)),          # b1
            pl.BlockSpec((9, 16, 16), lambda i: (0, 0, 0)),   # w2 [tap, out, in]
            pl.BlockSpec((16, 1), lambda i: (0, 0)),          # b2
            pl.BlockSpec((9, 32, 16), lambda i: (0, 0, 0)),   # w3 [tap, out, in]
            pl.BlockSpec((32, 1), lambda i: (0, 0)),          # b3
            pl.BlockSpec((P, Wp), lambda i: (0, 0)),          # averaging matrix
        ],
        out_specs=pl.BlockSpec((Bt, 32, Wp), lambda i: (i, 0, 0)),
        compiler_params=pltpu.CompilerParams(
            dimension_semantics=("parallel",),
            vmem_limit_bytes=vmem_limit),
        cost_estimate=pl.CostEstimate(
            flops=flops, transcendentals=trans, bytes_accessed=bytes_acc),
    )(x2d, w1k, b1k, w2k, b2k, w3k, b3k, avg)
    return out                                               # [B, 32, W-4]


def reference_forward(x_nchw, params):
    """Pure-JAX reference (lax conv) for the correctness check."""
    w1, b1, w2, b2, w3, b3 = params
    x = jnp.transpose(x_nchw, (0, 2, 3, 1))                  # NHWC
    dn = ("NHWC", "HWIO", "NHWC")
    y = _elu(jnp.einsum("bhwc,co->bhwo", x, w1) + b1)
    y = _elu(lax.conv_general_dilated(y, w2, (1, 1), "VALID",
                                      dimension_numbers=dn) + b2)
    y = _elu(lax.conv_general_dilated(y, w3, (1, 1), "VALID",
                                      dimension_numbers=dn) + b3)
    m = jnp.mean(y, axis=1)                                  # mean over H
    ls = jax.nn.log_softmax(m, axis=-1)
    return jnp.transpose(ls, (0, 2, 1))                      # [B, 32, W-4]


def init_params(key):
    k1, k2, k3, k4, k5, k6 = jax.random.split(key, 6)
    # Conv weights stored HWIO ([I, O] for the 1x1 conv), small init scale.
    w1 = 0.1 * jax.random.normal(k1, (3, 16), jnp.float32)
    b1 = 0.1 * jax.random.normal(k2, (16,), jnp.float32)
    w2 = 0.1 * jax.random.normal(k3, (3, 3, 16, 16), jnp.float32)
    b2 = 0.1 * jax.random.normal(k4, (16,), jnp.float32)
    w3 = 0.1 * jax.random.normal(k5, (3, 3, 16, 32), jnp.float32)
    b3 = 0.1 * jax.random.normal(k6, (32,), jnp.float32)
    return (w1, b1, w2, b2, w3, b3)


if __name__ == "__main__":
    # TODO(synk): self.max_pool = nn.MaxPool2d() is unused in forward (and would
    # not construct in PyTorch without a kernel_size), so it is omitted.
    key = jax.random.PRNGKey(0)
    kx, kp = jax.random.split(key)
    B, C, H, W = 2, 3, 16, 16
    x = jax.random.normal(kx, (B, C, H, W), jnp.float32)     # NCHW like PyTorch
    params = init_params(kp)
    prepped = prepare_params(params, H, W)                   # hoisted, once per params

    out = jax.block_until_ready(minimal_model_forward(x, prepped))
    ref = jax.block_until_ready(reference_forward(x, params))

    assert out.shape == (B, 32, W - 4), out.shape
    err = float(jnp.max(jnp.abs(out - ref)))
    assert err < 1e-4, err
    print("KERNEL_OK")
</pallas_src>

<mosaic_0001>
module attributes {stable_mosaic.version = 11 : i64} {
  func.func @kernel(%arg0: i32, %arg1: memref<3x256xf32, #tpu.memory_space<vmem>>, %arg2: memref<16x3xf32, #tpu.memory_space<vmem>>, %arg3: memref<16x1xf32, #tpu.memory_space<vmem>>, %arg4: memref<9x16x16xf32, #tpu.memory_space<vmem>>, %arg5: memref<16x1xf32, #tpu.memory_space<vmem>>, %arg6: memref<9x32x16xf32, #tpu.memory_space<vmem>>, %arg7: memref<32x1xf32, #tpu.memory_space<vmem>>, %arg8: memref<256x12xf32, #tpu.memory_space<vmem>>, %arg9: memref<1x32x12xf32, #tpu.memory_space<vmem>>) attributes {dimension_semantics = [#tpu.dimension_semantics<parallel>], iteration_bounds = array<i64: 2>, scalar_prefetch = 0 : i64, scratch_operands = 0 : i64, tpu.core_type = #tpu.core_type<tc>, window_params = [{transform_indices = @transform_0, window_bounds = array<i64: 3, 256>}, {pipeline_mode = #tpu.pipeline_mode<synchronous>, transform_indices = @transform_1, window_bounds = array<i64: 16, 3>}, {pipeline_mode = #tpu.pipeline_mode<synchronous>, transform_indices = @transform_2, window_bounds = array<i64: 16, 1>}, {pipeline_mode = #tpu.pipeline_mode<synchronous>, transform_indices = @transform_3, window_bounds = array<i64: 9, 16, 16>}, {pipeline_mode = #tpu.pipeline_mode<synchronous>, transform_indices = @transform_4, window_bounds = array<i64: 16, 1>}, {pipeline_mode = #tpu.pipeline_mode<synchronous>, transform_indices = @transform_5, window_bounds = array<i64: 9, 32, 16>}, {pipeline_mode = #tpu.pipeline_mode<synchronous>, transform_indices = @transform_6, window_bounds = array<i64: 32, 1>}, {pipeline_mode = #tpu.pipeline_mode<synchronous>, transform_indices = @transform_7, window_bounds = array<i64: 256, 12>}, {transform_indices = @transform_8, window_bounds = array<i64: 1, 32, 12>}]} {
    %c0 = arith.constant 0 : index
    %c0_0 = arith.constant 0 : index
    %0 = vector.load %arg1[%c0, %c0_0] : memref<3x256xf32, #tpu.memory_space<vmem>>, vector<3x256xf32>
    %c0_1 = arith.constant 0 : index
    %c0_2 = arith.constant 0 : index
    %1 = vector.load %arg2[%c0_1, %c0_2] : memref<16x3xf32, #tpu.memory_space<vmem>>, vector<16x3xf32>
    %2 = vector.extract_strided_slice %1 {offsets = [0, 0], sizes = [16, 1], strides = [1, 1]} : vector<16x3xf32> to vector<16x1xf32>
    %3 = vector.extract_strided_slice %0 {offsets = [0, 0], sizes = [1, 256], strides = [1, 1]} : vector<3x256xf32> to vector<1x256xf32>
    %4 = vector.broadcast %2 : vector<16x1xf32> to vector<16x256xf32>
    %5 = vector.broadcast %3 : vector<1x256xf32> to vector<16x256xf32>
    %6 = arith.mulf %4, %5 : vector<16x256xf32>
    %7 = vector.extract_strided_slice %1 {offsets = [0, 1], sizes = [16, 1], strides = [1, 1]} : vector<16x3xf32> to vector<16x1xf32>
    %8 = vector.extract_strided_slice %0 {offsets = [1, 0], sizes = [1, 256], strides = [1, 1]} : vector<3x256xf32> to vector<1x256xf32>
    %9 = vector.broadcast %7 : vector<16x1xf32> to vector<16x256xf32>
    %10 = vector.broadcast %8 : vector<1x256xf32> to vector<16x256xf32>
    %11 = arith.mulf %9, %10 : vector<16x256xf32>
    %12 = arith.addf %6, %11 : vector<16x256xf32>
    %13 = vector.extract_strided_slice %1 {offsets = [0, 2], sizes = [16, 1], strides = [1, 1]} : vector<16x3xf32> to vector<16x1xf32>
    %14 = vector.extract_strided_slice %0 {offsets = [2, 0], sizes = [1, 256], strides = [1, 1]} : vector<3x256xf32> to vector<1x256xf32>
    %15 = vector.broadcast %13 : vector<16x1xf32> to vector<16x256xf32>
    %16 = vector.broadcast %14 : vector<1x256xf32> to vector<16x256xf32>
    %17 = arith.mulf %15, %16 : vector<16x256xf32>
    %18 = arith.addf %12, %17 : vector<16x256xf32>
    %c0_3 = arith.constant 0 : index
    %c0_4 = arith.constant 0 : index
    %19 = vector.load %arg3[%c0_3, %c0_4] : memref<16x1xf32, #tpu.memory_space<vmem>>, vector<16x1xf32>
    %20 = vector.broadcast %19 : vector<16x1xf32> to vector<16x256xf32>
    %21 = arith.addf %18, %20 : vector<16x256xf32>
    %cst = arith.constant 0.000000e+00 : f32
    %22 = vector.broadcast %cst : f32 to vector<16x256xf32>
    %23 = arith.cmpf ogt, %21, %22 : vector<16x256xf32>
    %24 = math.exp %21 : vector<16x256xf32>
    %cst_5 = arith.constant 1.000000e+00 : f32
    %25 = vector.broadcast %cst_5 : f32 to vector<16x256xf32>
    %26 = arith.subf %24, %25 : vector<16x256xf32>
    %27 = arith.select %23, %21, %26 : vector<16x256xi1>, vector<16x256xf32>
    %c0_6 = arith.constant 0 : index
    %c0_7 = arith.constant 0 : index
    %c0_8 = arith.constant 0 : index
    %28 = vector.load %arg4[%c0_6, %c0_7, %c0_8] : memref<9x16x16xf32, #tpu.memory_space<vmem>>, vector<9x16x16xf32>
    %29 = vector.extract_strided_slice %28 {offsets = [0, 0, 0], sizes = [1, 16, 16], strides = [1, 1, 1]} : vector<9x16x16xf32> to vector<1x16x16xf32>
    %30 = vector.shape_cast %29 : vector<1x16x16xf32> to vector<16x16xf32>
    %cst_9 = arith.constant dense<0.000000e+00> : vector<16x256xf32>
    %31 = tpu.matmul %30, %27, %cst_9 {dimension_numbers = #tpu.dot_dimension_numbers<[1], [0], [0], [1], [0, 0, 1, 1], [], []>} : vector<16x16xf32>, vector<16x256xf32>, vector<16x256xf32> -> vector<16x256xf32>
    %c255_i32 = arith.constant 255 : i32
    %32 = tpu.dynamic_rotate %27 by %c255_i32 dim 1 : vector<16x256xf32>, i32 -> vector<16x256xf32>
    %33 = vector.extract_strided_slice %28 {offsets = [1, 0, 0], sizes = [1, 16, 16], strides = [1, 1, 1]} : vector<9x16x16xf32> to vector<1x16x16xf32>
    %34 = vector.shape_cast %33 : vector<1x16x16xf32> to vector<16x16xf32>
    %cst_10 = arith.constant dense<0.000000e+00> : vector<16x256xf32>
    %35 = tpu.matmul %34, %32, %cst_10 {dimension_numbers = #tpu.dot_dimension_numbers<[1], [0], [0], [1], [0, 0, 1, 1], [], []>} : vector<16x16xf32>, vector<16x256xf32>, vector<16x256xf32> -> vector<16x256xf32>
    %36 = arith.addf %31, %35 : vector<16x256xf32>
    %c254_i32 = arith.constant 254 : i32
    %37 = tpu.dynamic_rotate %27 by %c254_i32 dim 1 : vector<16x256xf32>, i32 -> vector<16x256xf32>
    %38 = vector.extract_strided_slice %28 {offsets = [2, 0, 0], sizes = [1, 16, 16], strides = [1, 1, 1]} : vector<9x16x16xf32> to vector<1x16x16xf32>
    %39 = vector.shape_cast %38 : vector<1x16x16xf32> to vector<16x16xf32>
    %cst_11 = arith.constant dense<0.000000e+00> : vector<16x256xf32>
    %40 = tpu.matmul %39, %37, %cst_11 {dimension_numbers = #tpu.dot_dimension_numbers<[1], [0], [0], [1], [0, 0, 1, 1], [], []>} : vector<16x16xf32>, vector<16x256xf32>, vector<16x256xf32> -> vector<16x256xf32>
    %41 = arith.addf %36, %40 : vector<16x256xf32>
    %c240_i32 = arith.constant 240 : i32
    %42 = tpu.dynamic_rotate %27 by %c240_i32 dim 1 : vector<16x256xf32>, i32 -> vector<16x256xf32>
    %43 = vector.extract_strided_slice %28 {offsets = [3, 0, 0], sizes = [1, 16, 16], strides = [1, 1, 1]} : vector<9x16x16xf32> to vector<1x16x16xf32>
    %44 = vector.shape_cast %43 : vector<1x16x16xf32> to vector<16x16xf32>
    %cst_12 = arith.constant dense<0.000000e+00> : vector<16x256xf32>
    %45 = tpu.matmul %44, %42, %cst_12 {dimension_numbers = #tpu.dot_dimension_numbers<[1], [0], [0], [1], [0, 0, 1, 1], [], []>} : vector<16x16xf32>, vector<16x256xf32>, vector<16x256xf32> -> vector<16x256xf32>
    %46 = arith.addf %41, %45 : vector<16x256xf32>
    %c239_i32 = arith.constant 239 : i32
    %47 = tpu.dynamic_rotate %27 by %c239_i32 dim 1 : vector<16x256xf32>, i32 -> vector<16x256xf32>
    %48 = vector.extract_strided_slice %28 {offsets = [4, 0, 0], sizes = [1, 16, 16], strides = [1, 1, 1]} : vector<9x16x16xf32> to vector<1x16x16xf32>
    %49 = vector.shape_cast %48 : vector<1x16x16xf32> to vector<16x16xf32>
    %cst_13 = arith.constant dense<0.000000e+00> : vector<16x256xf32>
    %50 = tpu.matmul %49, %47, %cst_13 {dimension_numbers = #tpu.dot_dimension_numbers<[1], [0], [0], [1], [0, 0, 1, 1], [], []>} : vector<16x16xf32>, vector<16x256xf32>, vector<16x256xf32> -> vector<16x256xf32>
    %51 = arith.addf %46, %50 : vector<16x256xf32>
    %c238_i32 = arith.constant 238 : i32
    %52 = tpu.dynamic_rotate %27 by %c238_i32 dim 1 : vector<16x256xf32>, i32 -> vector<16x256xf32>
    %53 = vector.extract_strided_slice %28 {offsets = [5, 0, 0], sizes = [1, 16, 16], strides = [1, 1, 1]} : vector<9x16x16xf32> to vector<1x16x16xf32>
    %54 = vector.shape_cast %53 : vector<1x16x16xf32> to vector<16x16xf32>
    %cst_14 = arith.constant dense<0.000000e+00> : vector<16x256xf32>
    %55 = tpu.matmul %54, %52, %cst_14 {dimension_numbers = #tpu.dot_dimension_numbers<[1], [0], [0], [1], [0, 0, 1, 1], [], []>} : vector<16x16xf32>, vector<16x256xf32>, vector<16x256xf32> -> vector<16x256xf32>
    %56 = arith.addf %51, %55 : vector<16x256xf32>
    %c224_i32 = arith.constant 224 : i32
    %57 = tpu.dynamic_rotate %27 by %c224_i32 dim 1 : vector<16x256xf32>, i32 -> vector<16x256xf32>
    %58 = vector.extract_strided_slice %28 {offsets = [6, 0, 0], sizes = [1, 16, 16], strides = [1, 1, 1]} : vector<9x16x16xf32> to vector<1x16x16xf32>
    %59 = vector.shape_cast %58 : vector<1x16x16xf32> to vector<16x16xf32>
    %cst_15 = arith.constant dense<0.000000e+00> : vector<16x256xf32>
    %60 = tpu.matmul %59, %57, %cst_15 {dimension_numbers = #tpu.dot_dimension_numbers<[1], [0], [0], [1], [0, 0, 1, 1], [], []>} : vector<16x16xf32>, vector<16x256xf32>, vector<16x256xf32> -> vector<16x256xf32>
    %61 = arith.addf %56, %60 : vector<16x256xf32>
    %c223_i32 = arith.constant 223 : i32
    %62 = tpu.dynamic_rotate %27 by %c223_i32 dim 1 : vector<16x256xf32>, i32 -> vector<16x256xf32>
    %63 = vector.extract_strided_slice %28 {offsets = [7, 0, 0], sizes = [1, 16, 16], strides = [1, 1, 1]} : vector<9x16x16xf32> to vector<1x16x16xf32>
    %64 = vector.shape_cast %63 : vector<1x16x16xf32> to vector<16x16xf32>
    %cst_16 = arith.constant dense<0.000000e+00> : vector<16x256xf32>
    %65 = tpu.matmul %64, %62, %cst_16 {dimension_numbers = #tpu.dot_dimension_numbers<[1], [0], [0], [1], [0, 0, 1, 1], [], []>} : vector<16x16xf32>, vector<16x256xf32>, vector<16x256xf32> -> vector<16x256xf32>
    %66 = arith.addf %61, %65 : vector<16x256xf32>
    %c222_i32 = arith.constant 222 : i32
    %67 = tpu.dynamic_rotate %27 by %c222_i32 dim 1 : vector<16x256xf32>, i32 -> vector<16x256xf32>
    %68 = vector.extract_strided_slice %28 {offsets = [8, 0, 0], sizes = [1, 16, 16], strides = [1, 1, 1]} : vector<9x16x16xf32> to vector<1x16x16xf32>
    %69 = vector.shape_cast %68 : vector<1x16x16xf32> to vector<16x16xf32>
    %cst_17 = arith.constant dense<0.000000e+00> : vector<16x256xf32>
    %70 = tpu.matmul %69, %67, %cst_17 {dimension_numbers = #tpu.dot_dimension_numbers<[1], [0], [0], [1], [0, 0, 1, 1], [], []>} : vector<16x16xf32>, vector<16x256xf32>, vector<16x256xf32> -> vector<16x256xf32>
    %71 = arith.addf %66, %70 : vector<16x256xf32>
    %c0_18 = arith.constant 0 : index
    %c0_19 = arith.constant 0 : index
    %72 = vector.load %arg5[%c0_18, %c0_19] : memref<16x1xf32, #tpu.memory_space<vmem>>, vector<16x1xf32>
    %73 = vector.broadcast %72 : vector<16x1xf32> to vector<16x256xf32>
    %74 = arith.addf %71, %73 : vector<16x256xf32>
    %cst_20 = arith.constant 0.000000e+00 : f32
    %75 = vector.broadcast %cst_20 : f32 to vector<16x256xf32>
    %76 = arith.cmpf ogt, %74, %75 : vector<16x256xf32>
    %77 = math.exp %74 : vector<16x256xf32>
    %cst_21 = arith.constant 1.000000e+00 : f32
    %78 = vector.broadcast %cst_21 : f32 to vector<16x256xf32>
    %79 = arith.subf %77, %78 : vector<16x256xf32>
    %80 = arith.select %76, %74, %79 : vector<16x256xi1>, vector<16x256xf32>
    %c0_22 = arith.constant 0 : index
    %c0_23 = arith.constant 0 : index
    %c0_24 = arith.constant 0 : index
    %81 = vector.load %arg6[%c0_22, %c0_23, %c0_24] : memref<9x32x16xf32, #tpu.memory_space<vmem>>, vector<9x32x16xf32>
    %82 = vector.extract_strided_slice %81 {offsets = [0, 0, 0], sizes = [1, 32, 16], strides = [1, 1, 1]} : vector<9x32x16xf32> to vector<1x32x16xf32>
    %83 = vector.shape_cast %82 : vector<1x32x16xf32> to vector<32x16xf32>
    %cst_25 = arith.constant dense<0.000000e+00> : vector<32x256xf32>
    %84 = tpu.matmul %83, %80, %cst_25 {dimension_numbers = #tpu.dot_dimension_numbers<[1], [0], [0], [1], [0, 0, 1, 1], [], []>} : vector<32x16xf32>, vector<16x256xf32>, vector<32x256xf32> -> vector<32x256xf32>
    %c255_i32_26 = arith.constant 255 : i32
    %85 = tpu.dynamic_rotate %80 by %c255_i32_26 dim 1 : vector<16x256xf32>, i32 -> vector<16x256xf32>
    %86 = vector.extract_strided_slice %81 {offsets = [1, 0, 0], sizes = [1, 32, 16], strides = [1, 1, 1]} : vector<9x32x16xf32> to vector<1x32x16xf32>
    %87 = vector.shape_cast %86 : vector<1x32x16xf32> to vector<32x16xf32>
    %cst_27 = arith.constant dense<0.000000e+00> : vector<32x256xf32>
    %88 = tpu.matmul %87, %85, %cst_27 {dimension_numbers = #tpu.dot_dimension_numbers<[1], [0], [0], [1], [0, 0, 1, 1], [], []>} : vector<32x16xf32>, vector<16x256xf32>, vector<32x256xf32> -> vector<32x256xf32>
    %89 = arith.addf %84, %88 : vector<32x256xf32>
    %c254_i32_28 = arith.constant 254 : i32
    %90 = tpu.dynamic_rotate %80 by %c254_i32_28 dim 1 : vector<16x256xf32>, i32 -> vector<16x256xf32>
    %91 = vector.extract_strided_slice %81 {offsets = [2, 0, 0], sizes = [1, 32, 16], strides = [1, 1, 1]} : vector<9x32x16xf32> to vector<1x32x16xf32>
    %92 = vector.shape_cast %91 : vector<1x32x16xf32> to vector<32x16xf32>
    %cst_29 = arith.constant dense<0.000000e+00> : vector<32x256xf32>
    %93 = tpu.matmul %92, %90, %cst_29 {dimension_numbers = #tpu.dot_dimension_numbers<[1], [0], [0], [1], [0, 0, 1, 1], [], []>} : vector<32x16xf32>, vector<16x256xf32>, vector<32x256xf32> -> vector<32x256xf32>
    %94 = arith.addf %89, %93 : vector<32x256xf32>
    %c240_i32_30 = arith.constant 240 : i32
    %95 = tpu.dynamic_rotate %80 by %c240_i32_30 dim 1 : vector<16x256xf32>, i32 -> vector<16x256xf32>
    %96 = vector.extract_strided_slice %81 {offsets = [3, 0, 0], sizes = [1, 32, 16], strides = [1, 1, 1]} : vector<9x32x16xf32> to vector<1x32x16xf32>
    %97 = vector.shape_cast %96 : vector<1x32x16xf32> to vector<32x16xf32>
    %cst_31 = arith.constant dense<0.000000e+00> : vector<32x256xf32>
    %98 = tpu.matmul %97, %95, %cst_31 {dimension_numbers = #tpu.dot_dimension_numbers<[1], [0], [0], [1], [0, 0, 1, 1], [], []>} : vector<32x16xf32>, vector<16x256xf32>, vector<32x256xf32> -> vector<32x256xf32>
    %99 = arith.addf %94, %98 : vector<32x256xf32>
    %c239_i32_32 = arith.constant 239 : i32
    %100 = tpu.dynamic_rotate %80 by %c239_i32_32 dim 1 : vector<16x256xf32>, i32 -> vector<16x256xf32>
    %101 = vector.extract_strided_slice %81 {offsets = [4, 0, 0], sizes = [1, 32, 16], strides = [1, 1, 1]} : vector<9x32x16xf32> to vector<1x32x16xf32>
    %102 = vector.shape_cast %101 : vector<1x32x16xf32> to vector<32x16xf32>
    %cst_33 = arith.constant dense<0.000000e+00> : vector<32x256xf32>
    %103 = tpu.matmul %102, %100, %cst_33 {dimension_numbers = #tpu.dot_dimension_numbers<[1], [0], [0], [1], [0, 0, 1, 1], [], []>} : vector<32x16xf32>, vector<16x256xf32>, vector<32x256xf32> -> vector<32x256xf32>
    %104 = arith.addf %99, %103 : vector<32x256xf32>
    %c238_i32_34 = arith.constant 238 : i32
    %105 = tpu.dynamic_rotate %80 by %c238_i32_34 dim 1 : vector<16x256xf32>, i32 -> vector<16x256xf32>
    %106 = vector.extract_strided_slice %81 {offsets = [5, 0, 0], sizes = [1, 32, 16], strides = [1, 1, 1]} : vector<9x32x16xf32> to vector<1x32x16xf32>
    %107 = vector.shape_cast %106 : vector<1x32x16xf32> to vector<32x16xf32>
    %cst_35 = arith.constant dense<0.000000e+00> : vector<32x256xf32>
    %108 = tpu.matmul %107, %105, %cst_35 {dimension_numbers = #tpu.dot_dimension_numbers<[1], [0], [0], [1], [0, 0, 1, 1], [], []>} : vector<32x16xf32>, vector<16x256xf32>, vector<32x256xf32> -> vector<32x256xf32>
    %109 = arith.addf %104, %108 : vector<32x256xf32>
    %c224_i32_36 = arith.constant 224 : i32
    %110 = tpu.dynamic_rotate %80 by %c224_i32_36 dim 1 : vector<16x256xf32>, i32 -> vector<16x256xf32>
    %111 = vector.extract_strided_slice %81 {offsets = [6, 0, 0], sizes = [1, 32, 16], strides = [1, 1, 1]} : vector<9x32x16xf32> to vector<1x32x16xf32>
    %112 = vector.shape_cast %111 : vector<1x32x16xf32> to vector<32x16xf32>
    %cst_37 = arith.constant dense<0.000000e+00> : vector<32x256xf32>
    %113 = tpu.matmul %112, %110, %cst_37 {dimension_numbers = #tpu.dot_dimension_numbers<[1], [0], [0], [1], [0, 0, 1, 1], [], []>} : vector<32x16xf32>, vector<16x256xf32>, vector<32x256xf32> -> vector<32x256xf32>
    %114 = arith.addf %109, %113 : vector<32x256xf32>
    %c223_i32_38 = arith.constant 223 : i32
    %115 = tpu.dynamic_rotate %80 by %c223_i32_38 dim 1 : vector<16x256xf32>, i32 -> vector<16x256xf32>
    %116 = vector.extract_strided_slice %81 {offsets = [7, 0, 0], sizes = [1, 32, 16], strides = [1, 1, 1]} : vector<9x32x16xf32> to vector<1x32x16xf32>
    %117 = vector.shape_cast %116 : vector<1x32x16xf32> to vector<32x16xf32>
    %cst_39 = arith.constant dense<0.000000e+00> : vector<32x256xf32>
    %118 = tpu.matmul %117, %115, %cst_39 {dimension_numbers = #tpu.dot_dimension_numbers<[1], [0], [0], [1], [0, 0, 1, 1], [], []>} : vector<32x16xf32>, vector<16x256xf32>, vector<32x256xf32> -> vector<32x256xf32>
    %119 = arith.addf %114, %118 : vector<32x256xf32>
    %c222_i32_40 = arith.constant 222 : i32
    %120 = tpu.dynamic_rotate %80 by %c222_i32_40 dim 1 : vector<16x256xf32>, i32 -> vector<16x256xf32>
    %121 = vector.extract_strided_slice %81 {offsets = [8, 0, 0], sizes = [1, 32, 16], strides = [1, 1, 1]} : vector<9x32x16xf32> to vector<1x32x16xf32>
    %122 = vector.shape_cast %121 : vector<1x32x16xf32> to vector<32x16xf32>
    %cst_41 = arith.constant dense<0.000000e+00> : vector<32x256xf32>
    %123 = tpu.matmul %122, %120, %cst_41 {dimension_numbers = #tpu.dot_dimension_numbers<[1], [0], [0], [1], [0, 0, 1, 1], [], []>} : vector<32x16xf32>, vector<16x256xf32>, vector<32x256xf32> -> vector<32x256xf32>
    %124 = arith.addf %119, %123 : vector<32x256xf32>
    %c0_42 = arith.constant 0 : index
    %c0_43 = arith.constant 0 : index
    %125 = vector.load %arg7[%c0_42, %c0_43] : memref<32x1xf32, #tpu.memory_space<vmem>>, vector<32x1xf32>
    %126 = vector.broadcast %125 : vector<32x1xf32> to vector<32x256xf32>
    %127 = arith.addf %124, %126 : vector<32x256xf32>
    %cst_44 = arith.constant 0.000000e+00 : f32
    %128 = vector.broadcast %cst_44 : f32 to vector<32x256xf32>
    %129 = arith.cmpf ogt, %127, %128 : vector<32x256xf32>
    %130 = math.exp %127 : vector<32x256xf32>
    %cst_45 = arith.constant 1.000000e+00 : f32
    %131 = vector.broadcast %cst_45 : f32 to vector<32x256xf32>
    %132 = arith.subf %130, %131 : vector<32x256xf32>
    %133 = arith.select %129, %127, %132 : vector<32x256xi1>, vector<32x256xf32>
    %c0_46 = arith.constant 0 : index
    %c0_47 = arith.constant 0 : index
    %134 = vector.load %arg8[%c0_46, %c0_47] : memref<256x12xf32, #tpu.memory_space<vmem>>, vector<256x12xf32>
    %cst_48 = arith.constant dense<0.000000e+00> : vector<32x12xf32>
    %135 = tpu.matmul %133, %134, %cst_48 {dimension_numbers = #tpu.dot_dimension_numbers<[1], [0], [0], [1], [0, 0, 1, 1], [], []>} : vector<32x256xf32>, vector<256x12xf32>, vector<32x12xf32> -> vector<32x12xf32>
    %cst_49 = arith.constant dense<0xFF800000> : vector<12xf32>
    %136 = vector.multi_reduction <maximumf>, %135, %cst_49 [0] : vector<32x12xf32> to vector<12xf32>
    %137 = vector.shape_cast %136 : vector<12xf32> to vector<1x12xf32>
    %138 = vector.broadcast %137 : vector<1x12xf32> to vector<32x12xf32>
    %139 = arith.subf %135, %138 : vector<32x12xf32>
    %140 = math.exp %139 : vector<32x12xf32>
    %cst_50 = arith.constant dense<0.000000e+00> : vector<12xf32>
    %141 = vector.multi_reduction <add>, %140, %cst_50 [0] : vector<32x12xf32> to vector<12xf32>
    %142 = vector.shape_cast %141 : vector<12xf32> to vector<1x12xf32>
    %143 = math.log %142 : vector<1x12xf32>
    %144 = vector.broadcast %143 : vector<1x12xf32> to vector<32x12xf32>
    %145 = arith.subf %139, %144 : vector<32x12xf32>
    %c0_51 = arith.constant 0 : index
    %c0_52 = arith.constant 0 : index
    %c0_53 = arith.constant 0 : index
    %146 = vector.load %arg9[%c0_51, %c0_52, %c0_53] : memref<1x32x12xf32, #tpu.memory_space<vmem>>, vector<1x32x12xf32>
    %147 = vector.shape_cast %146 : vector<1x32x12xf32> to vector<32x12xf32>
    %148 = vector.shape_cast %145 : vector<32x12xf32> to vector<1x32x12xf32>
    tpu.vector_store %arg9[%c0_51, %c0_52, %c0_53], %148 {strides = array<i32>} : memref<1x32x12xf32, #tpu.memory_space<vmem>>, vector<1x32x12xf32>,
    return
  }
  func.func @transform_0(%arg0: i32) -> (i32, i32) {
    %c0_i32 = arith.constant 0 : i32
    %c0_i32_0 = arith.constant 0 : i32
    return %c0_i32, %arg0 : i32, i32
  }
  func.func @transform_1(%arg0: i32) -> (i32, i32) {
    %c0_i32 = arith.constant 0 : i32
    %c0_i32_0 = arith.constant 0 : i32
    %c0_i32_1 = arith.constant 0 : i32
    return %c0_i32, %c0_i32_0 : i32, i32
  }
  func.func @transform_2(%arg0: i32) -> (i32, i32) {
    %c0_i32 = arith.constant 0 : i32
    %c0_i32_0 = arith.constant 0 : i32
    %c0_i32_1 = arith.constant 0 : i32
    return %c0_i32, %c0_i32_0 : i32, i32
  }
  func.func @transform_3(%arg0: i32) -> (i32, i32, i32) {
    %c0_i32 = arith.constant 0 : i32
    %c0_i32_0 = arith.constant 0 : i32
    %c0_i32_1 = arith.constant 0 : i32
    %c0_i32_2 = arith.constant 0 : i32
    return %c0_i32, %c0_i32_0, %c0_i32_1 : i32, i32, i32
  }
  func.func @transform_4(%arg0: i32) -> (i32, i32) {
    %c0_i32 = arith.constant 0 : i32
    %c0_i32_0 = arith.constant 0 : i32
    %c0_i32_1 = arith.constant 0 : i32
    return %c0_i32, %c0_i32_0 : i32, i32
  }
  func.func @transform_5(%arg0: i32) -> (i32, i32, i32) {
    %c0_i32 = arith.constant 0 : i32
    %c0_i32_0 = arith.constant 0 : i32
    %c0_i32_1 = arith.constant 0 : i32
    %c0_i32_2 = arith.constant 0 : i32
    return %c0_i32, %c0_i32_0, %c0_i32_1 : i32, i32, i32
  }
  func.func @transform_6(%arg0: i32) -> (i32, i32) {
    %c0_i32 = arith.constant 0 : i32
    %c0_i32_0 = arith.constant 0 : i32
    %c0_i32_1 = arith.constant 0 : i32
    return %c0_i32, %c0_i32_0 : i32, i32
  }
  func.func @transform_7(%arg0: i32) -> (i32, i32) {
    %c0_i32 = arith.constant 0 : i32
    %c0_i32_0 = arith.constant 0 : i32
    %c0_i32_1 = arith.constant 0 : i32
    return %c0_i32, %c0_i32_0 : i32, i32
  }
  func.func @transform_8(%arg0: i32) -> (i32, i32, i32) {
    %c0_i32 = arith.constant 0 : i32
    %c0_i32_0 = arith.constant 0 : i32
    %c0_i32_1 = arith.constant 0 : i32
    return %arg0, %c0_i32, %c0_i32_0 : i32, i32, i32
  }
}

</mosaic_0001>

<llo_original>
// kernel: tpu_custom_call.1
$region0: #{tpu_custom_call.1}
  #allocation0 [shape = 'u32[]', space=smem, size = 0x4, offset = 0x4, fixed_abs, tag = 'smem constant byte address 0x4 - core index']
  #allocation1 [shape = 'u32[144,128]{1,0:T(1,128)}', space=vmem, size = 0x12000, scoped, tag = 'internal scratch']
  %s0 = inlined_call_operand.vmem [shape: f32[3,512], index: 0, kind: input, shape index: {}]
  %s1 = inlined_call_operand.vmem [shape: f32[16,3], index: 1, kind: input, shape index: {}]
  %s2 = inlined_call_operand.vmem [shape: f32[16,1], index: 2, kind: input, shape index: {}]
  %s3 = inlined_call_operand.vmem [shape: f32[9,16,16], index: 3, kind: input, shape index: {}]
  %s4 = inlined_call_operand.vmem [shape: f32[16,1], index: 4, kind: input, shape index: {}]
  %s5 = inlined_call_operand.vmem [shape: f32[9,32,16], index: 5, kind: input, shape index: {}]
  %s6 = inlined_call_operand.vmem [shape: f32[32,1], index: 6, kind: input, shape index: {}]
  %s7 = inlined_call_operand.vmem [shape: f32[256,12], index: 7, kind: input, shape index: {}]
  %s8 = inlined_call_operand.vmem [shape: f32[2,32,12], index: 8, kind: output, shape index: {}]
  %s9 = sld [smem:[#allocation0]]
  $region65: #{tpu_custom_call.1} parent=0
    _
  %s11 = ssub.s32 1, %s9
  %s12 = scalar_select 0, %s11, %s9
  loop: start=0, step=1, limit=4
  $region2: #{tpu_custom_call.1} parent=0 // loop_pre_header
    _
  $region3: #{tpu_custom_call.1} parent=0 // loop_header
    %s14 = sphi 0, %s18
    %p15 = scmp.ge.s32.totalorder %s14, 4
    %s24 = sphi 0, %s26
    %s27 = sphi 0, %s24
    %s28 = sphi 0, %s27
    %s44 = sphi 0, %s28
    %s48 = sphi 0, %s48
    %s50 = sphi 0, %s48
    %s51 = sphi 0, %s50
    %s65 = sphi 0, %s51
    %s69 = sphi 0, %s69
    %s71 = sphi 0, %s69
    %s72 = sphi 0, %s71
    %s86 = sphi 0, %s72
    %s90 = sphi 0, %s90
    %s92 = sphi 0, %s90
    %s93 = sphi 0, %s92
    %s107 = sphi 0, %s93
    %s111 = sphi 0, %s111
    %s113 = sphi 0, %s111
    %s114 = sphi 0, %s113
    %s128 = sphi 0, %s114
    %s132 = sphi 0, %s132
    %s134 = sphi 0, %s132
    %s135 = sphi 0, %s134
    %s149 = sphi 0, %s135
    %s153 = sphi 0, %s153
    %s155 = sphi 0, %s153
    %s156 = sphi 0, %s155
    %s170 = sphi 0, %s156
    %s174 = sphi 0, %s174
    %s176 = sphi 0, %s174
    %s177 = sphi 0, %s176
    %s191 = sphi 0, %s177
    %s197 = sphi 0, %s199
    %s200 = sphi 0, %s197
    %s201 = sphi 0, %s200
    %s217 = sphi 0, %s201
  $region4: #{tpu_custom_call.1} parent=0 // loop_header_branch
    %17 = sbr.rel (%p15) target = $region8
  $region5: #{tpu_custom_call.1} parent=0 // loop_body
    %s19 = ssub.s32 %s14, 1
    %s20 = ssub.s32 %s14, 2
    %s21 = sadd.s32 %s14, 1
    %s22 = ssub.s32 %s14, %s21
    %p23 = scmp.eq.s32.totalorder %s22, 0
    %s25 = sadd.s32 %s24, 1
    %s26 = scalar_select %p23, %s24, %s25
    %p29 = pneg %p23
    %p30 = scmp.eq.s32.totalorder %s14, 1
    %p31 = por %p29, %p30
    %p32 = scmp.ne.s32.totalorder %s24, %s27
    %p33 = scmp.eq.s32.totalorder %s14, 0
    %p34 = por %p32, %p33
    %p35 = scmp.ne.s32.totalorder %s24, %s27
    %p36 = scmp.eq.s32.totalorder %s19, 1
    %p37 = por %p35, %p36
    %p38 = scmp.ne.s32.totalorder %s27, %s28
    %p39 = scmp.eq.s32.totalorder %s19, 0
    %p40 = por %p38, %p39
    %p41 = scmp.ne.s32.totalorder %s27, %s28
    %p42 = scmp.eq.s32.totalorder %s20, 1
    %p43 = por %p41, %p42
    %p45 = scmp.ne.s32.totalorder %s28, %s44
    %p46 = scmp.eq.s32.totalorder %s20, 0
    %p47 = por %p45, %p46
    %s49 = sadd.s32 %s48, 1
    %p52 = scmp.eq.s32.totalorder %s14, 1
    %p53 = scmp.ne.s32.totalorder %s48, %s50
    %p54 = scmp.eq.s32.totalorder %s14, 0
    %p55 = por %p53, %p54
    %p56 = scmp.ne.s32.totalorder %s48, %s50
    %p57 = scmp.eq.s32.totalorder %s19, 1
    %p58 = por %p56, %p57
    %p59 = scmp.ne.s32.totalorder %s50, %s51
    %p60 = scmp.eq.s32.totalorder %s19, 0
    %p61 = por %p59, %p60
    %p62 = scmp.ne.s32.totalorder %s50, %s51
    %p63 = scmp.eq.s32.totalorder %s20, 1
    %p64 = por %p62, %p63
    %p66 = scmp.ne.s32.totalorder %s51, %s65
    %p67 = scmp.eq.s32.totalorder %s20, 0
    %p68 = por %p66, %p67
    %s70 = sadd.s32 %s69, 1
    %p73 = scmp.eq.s32.totalorder %s14, 1
    %p74 = scmp.ne.s32.totalorder %s69, %s71
    %p75 = scmp.eq.s32.totalorder %s14, 0
    %p76 = por %p74, %p75
    %p77 = scmp.ne.s32.totalorder %s69, %s71
    %p78 = scmp.eq.s32.totalorder %s19, 1
    %p79 = por %p77, %p78
    %p80 = scmp.ne.s32.totalorder %s71, %s72
    %p81 = scmp.eq.s32.totalorder %s19, 0
    %p82 = por %p80, %p81
    %p83 = scmp.ne.s32.totalorder %s71, %s72
    %p84 = scmp.eq.s32.totalorder %s20, 1
    %p85 = por %p83, %p84
    %p87 = scmp.ne.s32.totalorder %s72, %s86
    %p88 = scmp.eq.s32.totalorder %s20, 0
    %p89 = por %p87, %p88
    %s91 = sadd.s32 %s90, 1
    %p94 = scmp.eq.s32.totalorder %s14, 1
    %p95 = scmp.ne.s32.totalorder %s90, %s92
    %p96 = scmp.eq.s32.totalorder %s14, 0
    %p97 = por %p95, %p96
    %p98 = scmp.ne.s32.totalorder %s90, %s92
    %p99 = scmp.eq.s32.totalorder %s19, 1
    %p100 = por %p98, %p99
    %p101 = scmp.ne.s32.totalorder %s92, %s93
    %p102 = scmp.eq.s32.totalorder %s19, 0
    %p103 = por %p101, %p102
    %p104 = scmp.ne.s32.totalorder %s92, %s93
    %p105 = scmp.eq.s32.totalorder %s20, 1
    %p106 = por %p104, %p105
    %p108 = scmp.ne.s32.totalorder %s93, %s107
    %p109 = scmp.eq.s32.totalorder %s20, 0
    %p110 = por %p108, %p109
    %s112 = sadd.s32 %s111, 1
    %p115 = scmp.eq.s32.totalorder %s14, 1
    %p116 = scmp.ne.s32.totalorder %s111, %s113
    %p117 = scmp.eq.s32.totalorder %s14, 0
    %p118 = por %p116, %p117
    %p119 = scmp.ne.s32.totalorder %s111, %s113
    %p120 = scmp.eq.s32.totalorder %s19, 1
    %p121 = por %p119, %p120
    %p122 = scmp.ne.s32.totalorder %s113, %s114
    %p123 = scmp.eq.s32.totalorder %s19, 0
    %p124 = por %p122, %p123
    %p125 = scmp.ne.s32.totalorder %s113, %s114
    %p126 = scmp.eq.s32.totalorder %s20, 1
    %p127 = por %p125, %p126
    %p129 = scmp.ne.s32.totalorder %s114, %s128
    %p130 = scmp.eq.s32.totalorder %s20, 0
    %p131 = por %p129, %p130
    %s133 = sadd.s32 %s132, 1
    %p136 = scmp.eq.s32.totalorder %s14, 1
    %p137 = scmp.ne.s32.totalorder %s132, %s134
    %p138 = scmp.eq.s32.totalorder %s14, 0
    %p139 = por %p137, %p138
    %p140 = scmp.ne.s32.totalorder %s132, %s134
    %p141 = scmp.eq.s32.totalorder %s19, 1
    %p142 = por %p140, %p141
    %p143 = scmp.ne.s32.totalorder %s134, %s135
    %p144 = scmp.eq.s32.totalorder %s19, 0
    %p145 = por %p143, %p144
    %p146 = scmp.ne.s32.totalorder %s134, %s135
    %p147 = scmp.eq.s32.totalorder %s20, 1
    %p148 = por %p146, %p147
    %p150 = scmp.ne.s32.totalorder %s135, %s149
    %p151 = scmp.eq.s32.totalorder %s20, 0
    %p152 = por %p150, %p151
    %s154 = sadd.s32 %s153, 1
    %p157 = scmp.eq.s32.totalorder %s14, 1
    %p158 = scmp.ne.s32.totalorder %s153, %s155
    %p159 = scmp.eq.s32.totalorder %s14, 0
    %p160 = por %p158, %p159
    %p161 = scmp.ne.s32.totalorder %s153, %s155
    %p162 = scmp.eq.s32.totalorder %s19, 1
    %p163 = por %p161, %p162
    %p164 = scmp.ne.s32.totalorder %s155, %s156
    %p165 = scmp.eq.s32.totalorder %s19, 0
    %p166 = por %p164, %p165
    %p167 = scmp.ne.s32.totalorder %s155, %s156
    %p168 = scmp.eq.s32.totalorder %s20, 1
    %p169 = por %p167, %p168
    %p171 = scmp.ne.s32.totalorder %s156, %s170
    %p172 = scmp.eq.s32.totalorder %s20, 0
    %p173 = por %p171, %p172
    %s175 = sadd.s32 %s174, 1
    %p178 = scmp.eq.s32.totalorder %s14, 1
    %p179 = scmp.ne.s32.totalorder %s174, %s176
    %p180 = scmp.eq.s32.totalorder %s14, 0
    %p181 = por %p179, %p180
    %p182 = scmp.ne.s32.totalorder %s174, %s176
    %p183 = scmp.eq.s32.totalorder %s19, 1
    %p184 = por %p182, %p183
    %p185 = scmp.ne.s32.totalorder %s176, %s177
    %p186 = scmp.eq.s32.totalorder %s19, 0
    %p187 = por %p185, %p186
    %p188 = scmp.ne.s32.totalorder %s176, %s177
    %p189 = scmp.eq.s32.totalorder %s20, 1
    %p190 = por %p188, %p189
    %p192 = scmp.ne.s32.totalorder %s177, %s191
    %p193 = scmp.eq.s32.totalorder %s20, 0
    %p194 = por %p192, %p193
    %s195 = ssub.s32 %s14, %s21
    %p196 = scmp.eq.s32.totalorder %s195, 0
    %s198 = sadd.s32 %s197, 1
    %s199 = scalar_select %p196, %s197, %s198
    %p202 = pneg %p196
    %p203 = scmp.eq.s32.totalorder %s14, 1
    %p204 = por %p202, %p203
    %p205 = scmp.ne.s32.totalorder %s197, %s200
    %p206 = scmp.eq.s32.totalorder %s14, 0
    %p207 = por %p205, %p206
    %p208 = scmp.ne.s32.totalorder %s197, %s200
    %p209 = scmp.eq.s32.totalorder %s19, 1
    %p210 = por %p208, %p209
    %p211 = scmp.ne.s32.totalorder %s200, %s201
    %p212 = scmp.eq.s32.totalorder %s19, 0
    %p213 = por %p211, %p212
    %p214 = scmp.ne.s32.totalorder %s200, %s201
    %p215 = scmp.eq.s32.totalorder %s20, 1
    %p216 = por %p214, %p215
    %p218 = scmp.ne.s32.totalorder %s201, %s217
    %p219 = scmp.eq.s32.totalorder %s20, 0
    %p220 = por %p218, %p219
    %p221 = scmp.le.s32.totalorder 1, %s14
    %p222 = scmp.lt.s32.totalorder %s14, 3
    %p223 = pnand %p221, %p222
    %p224 = pneg %p223
    // Predicated region
    $region9: #{tpu_custom_call.1} parent=5 // pred_check
      _
    $region10: #{tpu_custom_call.1} parent=5 // pred_check_branch
      %226 = sbr.rel (%p223) target = $region12
    $region11: #{tpu_custom_call.1} parent=5 // pred_region
      %s227 = ssub.s32 %s14, 1
      // Predicated region
      $region13: #{tpu_custom_call.1} parent=11 // pred_check
        %p228 = pneg %p61
      $region14: #{tpu_custom_call.1} parent=11 // pred_check_branch
        %230 = sbr.rel (%p228) target = $region16
      $region15: #{tpu_custom_call.1} parent=11 // pred_region
        _
      $region16: #{tpu_custom_call.1} parent=11 // pred_fallthru
        _
      // Predicated region
      $region17: #{tpu_custom_call.1} parent=11 // pred_check
        %p231 = pneg %p82
      $region18: #{tpu_custom_call.1} parent=11 // pred_check_branch
        %233 = sbr.rel (%p231) target = $region20
      $region19: #{tpu_custom_call.1} parent=11 // pred_region
        _
      $region20: #{tpu_custom_call.1} parent=11 // pred_fallthru
        _
      // Predicated region
      $region21: #{tpu_custom_call.1} parent=11 // pred_check
        %p234 = pneg %p103
      $region22: #{tpu_custom_call.1} parent=11 // pred_check_branch
        %236 = sbr.rel (%p234) target = $region24
      $region23: #{tpu_custom_call.1} parent=11 // pred_region
        _
      $region24: #{tpu_custom_call.1} parent=11 // pred_fallthru
        _
      // Predicated region
      $region25: #{tpu_custom_call.1} parent=11 // pred_check
        %p237 = pneg %p124
      $region26: #{tpu_custom_call.1} parent=11 // pred_check_branch
        %239 = sbr.rel (%p237) target = $region28
      $region27: #{tpu_custom_call.1} parent=11 // pred_region
        _
      $region28: #{tpu_custom_call.1} parent=11 // pred_fallthru
        _
      // Predicated region
      $region29: #{tpu_custom_call.1} parent=11 // pred_check
        %p240 = pneg %p145
      $region30: #{tpu_custom_call.1} parent=11 // pred_check_branch
        %242 = sbr.rel (%p240) target = $region32
      $region31: #{tpu_custom_call.1} parent=11 // pred_region
        _
      $region32: #{tpu_custom_call.1} parent=11 // pred_fallthru
        _
      // Predicated region
      $region33: #{tpu_custom_call.1} parent=11 // pred_check
        %p243 = pneg %p166
      $region34: #{tpu_custom_call.1} parent=11 // pred_check_branch
        %245 = sbr.rel (%p243) target = $region36
      $region35: #{tpu_custom_call.1} parent=11 // pred_region
        _
      $region36: #{tpu_custom_call.1} parent=11 // pred_fallthru
        _
      // Predicated region
      $region37: #{tpu_custom_call.1} parent=11 // pred_check
        %p246 = pneg %p187
      $region38: #{tpu_custom_call.1} parent=11 // pred_check_branch
        %248 = sbr.rel (%p246) target = $region40
      $region39: #{tpu_custom_call.1} parent=11 // pred_region
        _
      $region40: #{tpu_custom_call.1} parent=11 // pred_fallthru
        _
    $region12: #{tpu_custom_call.1} parent=5 // pred_fallthru
      _
    %p249 = scmp.lt.s32.totalorder %s14, 2
    // Predicated region
    $region41: #{tpu_custom_call.1} parent=5 // pred_check
      %p250 = pneg %p249
    $region42: #{tpu_custom_call.1} parent=5 // pred_check_branch
      %252 = sbr.rel (%p250) target = $region44
    $region43: #{tpu_custom_call.1} parent=5 // pred_region
      // Predicated region
      $region45: #{tpu_custom_call.1} parent=43 // pred_check
        %p253 = pneg %p34
      $region46: #{tpu_custom_call.1} parent=43 // pred_check_branch
        %255 = sbr.rel (%p253) target = $region48
      $region47: #{tpu_custom_call.1} parent=43 // pred_region
        %s256 = smul.u32 2, %s14
        %p257 = scmp.lt.s32.totalorder %s256, 3
        %s258 = scalar_select %p257, %s256, 3
        %s259 = smul.addr %s258, 4
        %s260 = scalar_lea.vmem %s0, %s259
        %s261 = smul.u32 2, %s14
      $region48: #{tpu_custom_call.1} parent=43 // pred_fallthru
        _
    $region44: #{tpu_custom_call.1} parent=5 // pred_fallthru
      _
    %p262 = scmp.le.s32.totalorder 1, %s14
    %p263 = scmp.lt.s32.totalorder %s14, 3
    %p264 = pnand %p262, %p263
    %p265 = pneg %p264
    // Predicated region
    $region49: #{tpu_custom_call.1} parent=5 // pred_check
      _
    $region50: #{tpu_custom_call.1} parent=5 // pred_check_branch
      %267 = sbr.rel (%p264) target = $region52
    $region51: #{tpu_custom_call.1} parent=5 // pred_region
      %s268 = ssub.s32 %s14, 1
      %s269 = smul.u32 2, %s19
      %p270 = scmp.lt.s32.totalorder %s269, 3
      %s271 = scalar_select %p270, %s269, 3
      %s272 = smul.addr %s271, 4
      %s273 = scalar_lea.vmem %s0, %s272
      %p274 = pneg %p40
      %p275 = pneg %p37
      %p276 = pneg %p61
      %p277 = pneg %p58
      %p278 = pneg %p82
      %p279 = pneg %p79
      %p280 = pneg %p103
      %p281 = pneg %p100
      %p282 = pneg %p124
      %p283 = pneg %p121
      %p284 = pneg %p145
      %p285 = pneg %p142
      %p286 = pneg %p166
      %p287 = pneg %p163
      %p288 = pneg %p187
      %p289 = pneg %p184
      %p290 = pneg %p213
      %p291 = pneg %p210
      %p292 = scmp.lt.s32.totalorder %s19, 1
      %s293 = scalar_select %p292, %s19, 1
      %s294 = smul.addr %s293, 4
      %s295 = smul.addr %s294, 8
      %s296 = scalar_lea.vmem %s8, %s295
      %s297 = smul.u32 2, %s19
      %p298 = scmp.lt.s32.totalorder %s297, 3
      %s299 = scalar_select %p298, %s297, 3
      %s300 = smul.addr %s299, 4
      %s301 = scalar_lea.vmem %s0, %s300
      %s302 = smul.u32 2, %s19
      %p303 = scmp.lt.s32.totalorder %s19, 1
      %s304 = scalar_select %p303, %s19, 1
      %s305 = smul.addr %s304, 4
      %s306 = smul.addr %s305, 8
      %s307 = scalar_lea.vmem %s8, %s306
      %v308 = vld [vmem:[%s301] sm:$0x77]
      %v309 = vld [vmem:[%s1] sm:$0xff]
      %v310 = vld [vmem:[%s1 + $0x8] sm:$0xff]
      %312 = vset.pattern.permute.xlu0 0
      %313 = vperm.xlu0 %312, %v309
      %v314 = vpop.permute.xlu0 %313
      %317 = vset.pattern.permute.xlu0 0
      %318 = vperm.xlu0 %317, %v310
      %v319 = vpop.permute.xlu0 %318
      %v322 = vlaneseq
      %v323 = vshrl.u32 %v322, 7
      %v324 = vsub.s32 0, %v323
      %v325 = vrot.slane %v308, %v324
      %v326 = vlaneseq
      %v327 = vshrl.u32 %v326, 7
      %v328 = vsub.s32 4, %v327
      %v329 = vrot.slane %v308, %v328
      %v332 = vlaneseq
      %v333 = vshrl.u32 %v332, 7
      %v334 = vsub.s32 0, %v333
      %v335 = vrot.slane %v325, %v334
      %v336 = vlaneseq
      %v337 = vshrl.u32 %v336, 7
      %v338 = vsub.s32 0, %v337
      %v339 = vrot.slane %v329, %v338
      %v340 = vmul.f32 %v314, %v335
      %v341 = vmul.f32 %v314, %v339
      %v342 = vmul.f32 %v319, %v335
      %v343 = vmul.f32 %v319, %v339
      %344 = vset.pattern.permute.xlu0 1
      %345 = vperm.xlu0 %344, %v309
      %v346 = vpop.permute.xlu0 %345
      %348 = vset.pattern.permute.xlu0 1
      %349 = vperm.xlu0 %348, %v310
      %v350 = vpop.permute.xlu0 %349
      %v352 = vlaneseq
      %v353 = vshrl.u32 %v352, 7
      %v354 = vsub.s32 1, %v353
      %v355 = vrot.slane %v308, %v354
      %v356 = vlaneseq
      %v357 = vshrl.u32 %v356, 7
      %v358 = vsub.s32 5, %v357
      %v359 = vrot.slane %v308, %v358
      %v362 = vlaneseq
      %v363 = vshrl.u32 %v362, 7
      %v364 = vsub.s32 1, %v363
      %v365 = vrot.slane %v355, %v364
      %v366 = vlaneseq
      %v367 = vshrl.u32 %v366, 7
      %v368 = vsub.s32 1, %v367
      %v369 = vrot.slane %v359, %v368
      %v370 = vmul.f32 %v346, %v365
      %v371 = vmul.f32 %v346, %v369
      %v372 = vmul.f32 %v350, %v365
      %v373 = vmul.f32 %v350, %v369
      %v374 = vadd.f32 %v340, %v370
      %v375 = vadd.f32 %v341, %v371
      %v376 = vadd.f32 %v342, %v372
      %v377 = vadd.f32 %v343, %v373
      %378 = vset.pattern.permute.xlu0 2
      %379 = vperm.xlu0 %378, %v309
      %v380 = vpop.permute.xlu0 %379
      %382 = vset.pattern.permute.xlu0 2
      %383 = vperm.xlu0 %382, %v310
      %v384 = vpop.permute.xlu0 %383
      %v386 = vlaneseq
      %v387 = vshrl.u32 %v386, 7
      %v388 = vsub.s32 2, %v387
      %v389 = vrot.slane %v308, %v388
      %v390 = vlaneseq
      %v391 = vshrl.u32 %v390, 7
      %v392 = vsub.s32 6, %v391
      %v393 = vrot.slane %v308, %v392
      %v396 = vlaneseq
      %v397 = vshrl.u32 %v396, 7
      %v398 = vsub.s32 2, %v397
      %v399 = vrot.slane %v389, %v398
      %v400 = vlaneseq
      %v401 = vshrl.u32 %v400, 7
      %v402 = vsub.s32 2, %v401
      %v403 = vrot.slane %v393, %v402
      %v404 = vmul.f32 %v380, %v399
      %v405 = vmul.f32 %v380, %v403
      %v406 = vmul.f32 %v384, %v399
      %v407 = vmul.f32 %v384, %v403
      %v408 = vadd.f32 %v374, %v404
      %v409 = vadd.f32 %v375, %v405
      %v410 = vadd.f32 %v376, %v406
      %v411 = vadd.f32 %v377, %v407
      %v412 = vld [vmem:[%s2] sm:$0xff]
      %v413 = vld [vmem:[%s2 + $0x8] sm:$0xff]
      %415 = vset.pattern.permute.xlu0 0
      %416 = vperm.xlu0 %415, %v412
      %v417 = vpop.permute.xlu0 %416
      %420 = vset.pattern.permute.xlu0 0
      %421 = vperm.xlu0 %420, %v413
      %v422 = vpop.permute.xlu0 %421
      %v424 = vadd.f32 %v408, %v417
      %v425 = vadd.f32 %v409, %v417
      %v426 = vadd.f32 %v410, %v422
      %v427 = vadd.f32 %v411, %v422
      %vm428 = vcmp.gt.f32.partialorder %v424, 0.0
      %vm429 = vcmp.gt.f32.partialorder %v425, 0.0
      %vm430 = vcmp.gt.f32.partialorder %v426, 0.0
      %vm431 = vcmp.gt.f32.partialorder %v427, 0.0
      %v432 = vmul.f32 %v424, 1.442695
      %v433 = vpow.pop %v432
      %v434 = vmul.f32 %v425, 1.442695
      %v435 = vpow.pop %v434
      %v436 = vmul.f32 %v426, 1.442695
      %v437 = vpow.pop %v436
      %v438 = vmul.f32 %v427, 1.442695
      %v439 = vpow.pop %v438
      %v440 = vsub.f32 %v433, 1.0
      %v441 = vsub.f32 %v435, 1.0
      %v442 = vsub.f32 %v437, 1.0
      %v443 = vsub.f32 %v439, 1.0
      %v444 = vsel %vm428, %v424, %v440
      %v445 = vsel %vm429, %v425, %v441
      %v446 = vsel %vm430, %v426, %v442
      %v447 = vsel %vm431, %v427, %v443
      %v448 = vld [vmem:[%s3] sm:$0xff]
      %v449 = vld [vmem:[%s3 + $0x8] sm:$0xff]
      %v450 = vld [vmem:[%s3 + $0x10] sm:$0xff]
      %v451 = vld [vmem:[%s3 + $0x18] sm:$0xff]
      %v452 = vld [vmem:[%s3 + $0x20] sm:$0xff]
      %v453 = vld [vmem:[%s3 + $0x28] sm:$0xff]
      %v454 = vld [vmem:[%s3 + $0x30] sm:$0xff]
      %v455 = vld [vmem:[%s3 + $0x38] sm:$0xff]
      %v456 = vld [vmem:[%s3 + $0x40] sm:$0xff]
      %v457 = vld [vmem:[%s3 + $0x48] sm:$0xff]
      %v458 = vld [vmem:[%s3 + $0x50] sm:$0xff]
      %v459 = vld [vmem:[%s3 + $0x58] sm:$0xff]
      %v460 = vld [vmem:[%s3 + $0x60] sm:$0xff]
      %v461 = vld [vmem:[%s3 + $0x68] sm:$0xff]
      %v462 = vld [vmem:[%s3 + $0x70] sm:$0xff]
      %v463 = vld [vmem:[%s3 + $0x78] sm:$0xff]
      %v464 = vld [vmem:[%s3 + $0x80] sm:$0xff]
      %v465 = vld [vmem:[%s3 + $0x88] sm:$0xff]
      %466 = vrot.lane.b32.xlu0 %v444, 127
      %v467 = vpop.permute.xlu0 %466
      %468 = vrot.lane.b32.xlu0 %v446, 127
      %v469 = vpop.permute.xlu0 %468
      %470 = vrot.lane.b32.xlu0 %v445, 127
      %v471 = vpop.permute.xlu0 %470
      %472 = vrot.lane.b32.xlu0 %v447, 127
      %v473 = vpop.permute.xlu0 %472
      %v474 = vlaneseq
      %v475 = vand.u32 %v474, 127
      %vm476 = vcmp.lt.s32.totalorder %v475, 127
      %v477 = vsel %vm476, %v467, %v471
      %v478 = vsel %vm476, %v469, %v473
      %v479 = vsel %vm476, %v471, %v467
      %v480 = vsel %vm476, %v473, %v469
      %vm481 = vcmask 130048
      %v483 = vsel %vm481, %v450, 0
      %v486 = vsel %vm481, %v451, 0
      %488 = vmatprep.subr.mxu0 %v479
      %489 = vmatpush1.msra.mxu0 %v477
      %490 = vmatprep.subr.mxu0 %v480
      %491 = vmatpush1.msra.mxu0 %v478
      %492 = vmatprep.subr.mxu0 0.0
      %493 = vmatpush1.msra.mxu0 0.0
      %494 = vmatprep.subr.mxu0 0.0
      %495 = vmatpush1.msra.mxu0 0.0
      %496 = vmatprep.subr.mxu0 0.0
      %497 = vmatpush1.msra.mxu0 0.0
      %498 = vmatprep.subr.mxu0 0.0
      %499 = vmatpush1.msra.mxu0 0.0
      %500 = vmatprep.subr.mxu0 0.0
      %501 = vmatpush1.msra.mxu0 0.0
      %502 = vmatprep.subr.mxu0 0.0
      %503 = vmatpush1.msra.mxu0 0.0
      %504 = vmatprep.subr.mxu0 0.0
      %505 = vmatpush1.msra.mxu0 0.0
      %506 = vmatprep.subr.mxu0 0.0
      %507 = vmatpush1.msra.mxu0 0.0
      %508 = vmatprep.subr.mxu0 0.0
      %509 = vmatpush1.msra.mxu0 0.0
      %510 = vmatprep.subr.mxu0 0.0
      %511 = vmatpush1.msra.mxu0 0.0
      %512 = vmatprep.subr.mxu0 0.0
      %513 = vmatpush1.msra.mxu0 0.0
      %514 = vmatprep.subr.mxu0 0.0
      %515 = vmatpush1.msra.mxu0 0.0
      %516 = vmatprep.subr.mxu0 0.0
      %517 = vmatpush1.msra.mxu0 0.0
      %518 = vmatprep.subr.mxu0 0.0
      %519 = vmatpush1.msra.mxu0 0.0
      %520 = vmatprep.subr.mxu0 0.0
      %521 = vmatpush1.msra.mxu0 0.0
      %522 = vmatprep.subr.mxu0 0.0
      %523 = vmatpush1.msra.mxu0 0.0
      %524 = vmatprep.subr.mxu0 0.0
      %525 = vmatpush1.msra.mxu0 0.0
      %526 = vmatprep.subr.mxu0 0.0
      %527 = vmatpush1.msra.mxu0 0.0
      %528 = vmatprep.subr.mxu0 0.0
      %529 = vmatpush1.msra.mxu0 0.0
      %530 = vmatprep.subr.mxu0 0.0
      %531 = vmatpush1.msra.mxu0 0.0
      %532 = vmatprep.subr.mxu0 0.0
      %533 = vmatpush1.msra.mxu0 0.0
      %534 = vmatprep.subr.mxu0 0.0
      %535 = vmatpush1.msra.mxu0 0.0
      %536 = vmatprep.subr.mxu0 0.0
      %537 = vmatpush1.msra.mxu0 0.0
      %538 = vmatprep.subr.mxu0 0.0
      %539 = vmatpush1.msra.mxu0 0.0
      %540 = vmatprep.subr.mxu0 0.0
      %541 = vmatpush1.msra.mxu0 0.0
      %542 = vmatprep.subr.mxu0 0.0
      %543 = vmatpush1.msra.mxu0 0.0
      %544 = vmatprep.subr.mxu0 0.0
      %545 = vmatpush1.msra.mxu0 0.0
      %546 = vmatprep.subr.mxu0 0.0
      %547 = vmatpush1.msra.mxu0 0.0
      %548 = vmatprep.subr.mxu0 0.0
      %549 = vmatpush1.msra.mxu0 0.0
      %550 = vmatprep.subr.mxu0 0.0
      %551 = vmatpush1.msra.mxu0 0.0
      %552 = vmatprep.mubr.f32.mxu0 0.0
      %553 = vmatmul.mubr.f32.gmra.mrb[0].mxu0 %v483
      %v554 = vpop.f32.mrb[0].mxu0
      %v555 = vadd.f32 0.0, %v554
      %v556 = vpop.f32.mrb[0].mxu0
      %v557 = vadd.f32 0.0, %v556
      %558 = vmatprep.mubr.f32.mxu0 0.0
      %559 = vmatmul.mubr.f32.gmra.mrb[0].mxu0 %v486
      %v560 = vpop.f32.mrb[0].mxu0
      %v561 = vadd.f32 0.0, %v560
      %v562 = vpop.f32.mrb[0].mxu0
      %v563 = vadd.f32 0.0, %v562
      %564 = vdwg.mxu0
      %v566 = vsel %vm481, %v448, 0
      %v569 = vsel %vm481, %v449, 0
      %571 = vmatprep.subr.mxu0 %v445
      %572 = vmatpush1.msra.mxu0 %v444
      %573 = vmatprep.subr.mxu0 %v447
      %574 = vmatpush1.msra.mxu0 %v446
      %575 = vmatprep.subr.mxu0 0.0
      %576 = vmatpush1.msra.mxu0 0.0
      %577 = vmatprep.subr.mxu0 0.0
      %578 = vmatpush1.msra.mxu0 0.0
      %579 = vmatprep.subr.mxu0 0.0
      %580 = vmatpush1.msra.mxu0 0.0
      %581 = vmatprep.subr.mxu0 0.0
      %582 = vmatpush1.msra.mxu0 0.0
      %583 = vmatprep.subr.mxu0 0.0
      %584 = vmatpush1.msra.mxu0 0.0
      %585 = vmatprep.subr.mxu0 0.0
      %586 = vmatpush1.msra.mxu0 0.0
      %587 = vmatprep.subr.mxu0 0.0
      %588 = vmatpush1.msra.mxu0 0.0
      %589 = vmatprep.subr.mxu0 0.0
      %590 = vmatpush1.msra.mxu0 0.0
      %591 = vmatprep.subr.mxu0 0.0
      %592 = vmatpush1.msra.mxu0 0.0
      %593 = vmatprep.subr.mxu0 0.0
      %594 = vmatpush1.msra.mxu0 0.0
      %595 = vmatprep.subr.mxu0 0.0
      %596 = vmatpush1.msra.mxu0 0.0
      %597 = vmatprep.subr.mxu0 0.0
      %598 = vmatpush1.msra.mxu0 0.0
      %599 = vmatprep.subr.mxu0 0.0
      %600 = vmatpush1.msra.mxu0 0.0
      %601 = vmatprep.subr.mxu0 0.0
      %602 = vmatpush1.msra.mxu0 0.0
      %603 = vmatprep.subr.mxu0 0.0
      %604 = vmatpush1.msra.mxu0 0.0
      %605 = vmatprep.subr.mxu0 0.0
      %606 = vmatpush1.msra.mxu0 0.0
      %607 = vmatprep.subr.mxu0 0.0
      %608 = vmatpush1.msra.mxu0 0.0
      %609 = vmatprep.subr.mxu0 0.0
      %610 = vmatpush1.msra.mxu0 0.0
      %611 = vmatprep.subr.mxu0 0.0
      %612 = vmatpush1.msra.mxu0 0.0
      %613 = vmatprep.subr.mxu0 0.0
      %614 = vmatpush1.msra.mxu0 0.0
      %615 = vmatprep.subr.mxu0 0.0
      %616 = vmatpush1.msra.mxu0 0.0
      %617 = vmatprep.subr.mxu0 0.0
      %618 = vmatpush1.msra.mxu0 0.0
      %619 = vmatprep.subr.mxu0 0.0
      %620 = vmatpush1.msra.mxu0 0.0
      %621 = vmatprep.subr.mxu0 0.0
      %622 = vmatpush1.msra.mxu0 0.0
      %623 = vmatprep.subr.mxu0 0.0
      %624 = vmatpush1.msra.mxu0 0.0
      %625 = vmatprep.subr.mxu0 0.0
      %626 = vmatpush1.msra.mxu0 0.0
      %627 = vmatprep.subr.mxu0 0.0
      %628 = vmatpush1.msra.mxu0 0.0
      %629 = vmatprep.subr.mxu0 0.0
      %630 = vmatpush1.msra.mxu0 0.0
      %631 = vmatprep.subr.mxu0 0.0
      %632 = vmatpush1.msra.mxu0 0.0
      %633 = vmatprep.subr.mxu0 0.0
      %634 = vmatpush1.msra.mxu0 0.0
      %635 = vmatprep.mubr.f32.mxu0 0.0
      %636 = vmatmul.mubr.f32.gmra.mrb[0].mxu0 %v566
      %v637 = vpop.f32.mrb[0].mxu0
      %v638 = vadd.f32 %v555, %v637
      %v639 = vpop.f32.mrb[0].mxu0
      %v640 = vadd.f32 %v557, %v639
      %641 = vmatprep.mubr.f32.mxu0 0.0
      %642 = vmatmul.mubr.f32.gmra.mrb[0].mxu0 %v569
      %v643 = vpop.f32.mrb[0].mxu0
      %v644 = vadd.f32 %v561, %v643
      %v645 = vpop.f32.mrb[0].mxu0
      %v646 = vadd.f32 %v563, %v645
      %647 = vdwg.mxu0
      %648 = vrot.lane.b32.xlu0 %v444, 126
      %v649 = vpop.permute.xlu0 %648
      %650 = vrot.lane.b32.xlu0 %v446, 126
      %v651 = vpop.permute.xlu0 %650
      %652 = vrot.lane.b32.xlu0 %v445, 126
      %v653 = vpop.permute.xlu0 %652
      %654 = vrot.lane.b32.xlu0 %v447, 126
      %v655 = vpop.permute.xlu0 %654
      %vm656 = vcmp.lt.s32.totalorder %v475, 126
      %v657 = vsel %vm656, %v649, %v653
      %v658 = vsel %vm656, %v651, %v655
      %v659 = vsel %vm656, %v653, %v649
      %v660 = vsel %vm656, %v655, %v651
      %v662 = vsel %vm481, %v452, 0
      %v665 = vsel %vm481, %v453, 0
      %667 = vmatprep.subr.mxu0 %v659
      %668 = vmatpush1.msra.mxu0 %v657
      %669 = vmatprep.subr.mxu0 %v660
      %670 = vmatpush1.msra.mxu0 %v658
      %671 = vmatprep.subr.mxu0 0.0
      %672 = vmatpush1.msra.mxu0 0.0
      %673 = vmatprep.subr.mxu0 0.0
      %674 = vmatpush1.msra.mxu0 0.0
      %675 = vmatprep.subr.mxu0 0.0
      %676 = vmatpush1.msra.mxu0 0.0
      %677 = vmatprep.subr.mxu0 0.0
      %678 = vmatpush1.msra.mxu0 0.0
      %679 = vmatprep.subr.mxu0 0.0
      %680 = vmatpush1.msra.mxu0 0.0
      %681 = vmatprep.subr.mxu0 0.0
      %682 = vmatpush1.msra.mxu0 0.0
      %683 = vmatprep.subr.mxu0 0.0
      %684 = vmatpush1.msra.mxu0 0.0
      %685 = vmatprep.subr.mxu0 0.0
      %686 = vmatpush1.msra.mxu0 0.0
      %687 = vmatprep.subr.mxu0 0.0
      %688 = vmatpush1.msra.mxu0 0.0
      %689 = vmatprep.subr.mxu0 0.0
      %690 = vmatpush1.msra.mxu0 0.0
      %691 = vmatprep.subr.mxu0 0.0
      %692 = vmatpush1.msra.mxu0 0.0
      %693 = vmatprep.subr.mxu0 0.0
      %694 = vmatpush1.msra.mxu0 0.0
      %695 = vmatprep.subr.mxu0 0.0
      %696 = vmatpush1.msra.mxu0 0.0
      %697 = vmatprep.subr.mxu0 0.0
      %698 = vmatpush1.msra.mxu0 0.0
      %699 = vmatprep.subr.mxu0 0.0
      %700 = vmatpush1.msra.mxu0 0.0
      %701 = vmatprep.subr.mxu0 0.0
      %702 = vmatpush1.msra.mxu0 0.0
      %703 = vmatprep.subr.mxu0 0.0
      %704 = vmatpush1.msra.mxu0 0.0
      %705 = vmatprep.subr.mxu0 0.0
      %706 = vmatpush1.msra.mxu0 0.0
      %707 = vmatprep.subr.mxu0 0.0
      %708 = vmatpush1.msra.mxu0 0.0
      %709 = vmatprep.subr.mxu0 0.0
      %710 = vmatpush1.msra.mxu0 0.0
      %711 = vmatprep.subr.mxu0 0.0
      %712 = vmatpush1.msra.mxu0 0.0
      %713 = vmatprep.subr.mxu0 0.0
      %714 = vmatpush1.msra.mxu0 0.0
      %715 = vmatprep.subr.mxu0 0.0
      %716 = vmatpush1.msra.mxu0 0.0
      %717 = vmatprep.subr.mxu0 0.0
      %718 = vmatpush1.msra.mxu0 0.0
      %719 = vmatprep.subr.mxu0 0.0
      %720 = vmatpush1.msra.mxu0 0.0
      %721 = vmatprep.subr.mxu0 0.0
      %722 = vmatpush1.msra.mxu0 0.0
      %723 = vmatprep.subr.mxu0 0.0
      %724 = vmatpush1.msra.mxu0 0.0
      %725 = vmatprep.subr.mxu0 0.0
      %726 = vmatpush1.msra.mxu0 0.0
      %727 = vmatprep.subr.mxu0 0.0
      %728 = vmatpush1.msra.mxu0 0.0
      %729 = vmatprep.subr.mxu0 0.0
      %730 = vmatpush1.msra.mxu0 0.0
      %731 = vmatprep.mubr.f32.mxu0 0.0
      %732 = vmatmul.mubr.f32.gmra.mrb[0].mxu0 %v662
      %v733 = vpop.f32.mrb[0].mxu0
      %v734 = vadd.f32 0.0, %v733
      %v735 = vpop.f32.mrb[0].mxu0
      %v736 = vadd.f32 0.0, %v735
      %737 = vmatprep.mubr.f32.mxu0 0.0
      %738 = vmatmul.mubr.f32.gmra.mrb[0].mxu0 %v665
      %v739 = vpop.f32.mrb[0].mxu0
      %v740 = vadd.f32 0.0, %v739
      %v741 = vpop.f32.mrb[0].mxu0
      %v742 = vadd.f32 0.0, %v741
      %743 = vdwg.mxu0
      %v744 = vadd.f32 %v638, %v734
      %v745 = vadd.f32 %v640, %v736
      %v746 = vadd.f32 %v644, %v740
      %v747 = vadd.f32 %v646, %v742
      %748 = vrot.lane.b32.xlu0 %v444, 112
      %v749 = vpop.permute.xlu0 %748
      %750 = vrot.lane.b32.xlu0 %v446, 112
      %v751 = vpop.permute.xlu0 %750
      %752 = vrot.lane.b32.xlu0 %v445, 112
      %v753 = vpop.permute.xlu0 %752
      %754 = vrot.lane.b32.xlu0 %v447, 112
      %v755 = vpop.permute.xlu0 %754
      %vm756 = vcmp.lt.s32.totalorder %v475, 112
      %v757 = vsel %vm756, %v749, %v753
      %v758 = vsel %vm756, %v751, %v755
      %v759 = vsel %vm756, %v753, %v749
      %v760 = vsel %vm756, %v755, %v751
      %v762 = vsel %vm481, %v454, 0
      %v765 = vsel %vm481, %v455, 0
      %767 = vmatprep.subr.mxu0 %v759
      %768 = vmatpush1.msra.mxu0 %v757
      %769 = vmatprep.subr.mxu0 %v760
      %770 = vmatpush1.msra.mxu0 %v758
      %771 = vmatprep.subr.mxu0 0.0
      %772 = vmatpush1.msra.mxu0 0.0
      %773 = vmatprep.subr.mxu0 0.0
      %774 = vmatpush1.msra.mxu0 0.0
      %775 = vmatprep.subr.mxu0 0.0
      %776 = vmatpush1.msra.mxu0 0.0
      %777 = vmatprep.subr.mxu0 0.0
      %778 = vmatpush1.msra.mxu0 0.0
      %779 = vmatprep.subr.mxu0 0.0
      %780 = vmatpush1.msra.mxu0 0.0
      %781 = vmatprep.subr.mxu0 0.0
      %782 = vmatpush1.msra.mxu0 0.0
      %783 = vmatprep.subr.mxu0 0.0
      %784 = vmatpush1.msra.mxu0 0.0
      %785 = vmatprep.subr.mxu0 0.0
      %786 = vmatpush1.msra.mxu0 0.0
      %787 = vmatprep.subr.mxu0 0.0
      %788 = vmatpush1.msra.mxu0 0.0
      %789 = vmatprep.subr.mxu0 0.0
      %790 = vmatpush1.msra.mxu0 0.0
      %791 = vmatprep.subr.mxu0 0.0
      %792 = vmatpush1.msra.mxu0 0.0
      %793 = vmatprep.subr.mxu0 0.0
      %794 = vmatpush1.msra.mxu0 0.0
      %795 = vmatprep.subr.mxu0 0.0
      %796 = vmatpush1.msra.mxu0 0.0
      %797 = vmatprep.subr.mxu0 0.0
      %798 = vmatpush1.msra.mxu0 0.0
      %799 = vmatprep.subr.mxu0 0.0
      %800 = vmatpush1.msra.mxu0 0.0
      %801 = vmatprep.subr.mxu0 0.0
      %802 = vmatpush1.msra.mxu0 0.0
      %803 = vmatprep.subr.mxu0 0.0
      %804 = vmatpush1.msra.mxu0 0.0
      %805 = vmatprep.subr.mxu0 0.0
      %806 = vmatpush1.msra.mxu0 0.0
      %807 = vmatprep.subr.mxu0 0.0
      %808 = vmatpush1.msra.mxu0 0.0
      %809 = vmatprep.subr.mxu0 0.0
      %810 = vmatpush1.msra.mxu0 0.0
      %811 = vmatprep.subr.mxu0 0.0
      %812 = vmatpush1.msra.mxu0 0.0
      %813 = vmatprep.subr.mxu0 0.0
      %814 = vmatpush1.msra.mxu0 0.0
      %815 = vmatprep.subr.mxu0 0.0
      %816 = vmatpush1.msra.mxu0 0.0
      %817 = vmatprep.subr.mxu0 0.0
      %818 = vmatpush1.msra.mxu0 0.0
      %819 = vmatprep.subr.mxu0 0.0
      %820 = vmatpush1.msra.mxu0 0.0
      %821 = vmatprep.subr.mxu0 0.0
      %822 = vmatpush1.msra.mxu0 0.0
      %823 = vmatprep.subr.mxu0 0.0
      %824 = vmatpush1.msra.mxu0 0.0
      %825 = vmatprep.subr.mxu0 0.0
      %826 = vmatpush1.msra.mxu0 0.0
      %827 = vmatprep.subr.mxu0 0.0
      %828 = vmatpush1.msra.mxu0 0.0
      %829 = vmatprep.subr.mxu0 0.0
      %830 = vmatpush1.msra.mxu0 0.0
      %831 = vmatprep.mubr.f32.mxu0 0.0
      %832 = vmatmul.mubr.f32.gmra.mrb[0].mxu0 %v762
      %v833 = vpop.f32.mrb[0].mxu0
      %v834 = vadd.f32 0.0, %v833
      %v835 = vpop.f32.mrb[0].mxu0
      %v836 = vadd.f32 0.0, %v835
      %837 = vmatprep.mubr.f32.mxu0 0.0
      %838 = vmatmul.mubr.f32.gmra.mrb[0].mxu0 %v765
      %v839 = vpop.f32.mrb[0].mxu0
      %v840 = vadd.f32 0.0, %v839
      %v841 = vpop.f32.mrb[0].mxu0
      %v842 = vadd.f32 0.0, %v841
      %843 = vdwg.mxu0
      %v844 = vadd.f32 %v744, %v834
      %v845 = vadd.f32 %v745, %v836
      %v846 = vadd.f32 %v746, %v840
      %v847 = vadd.f32 %v747, %v842
      %848 = vrot.lane.b32.xlu0 %v444, 111
      %v849 = vpop.permute.xlu0 %848
      %850 = vrot.lane.b32.xlu0 %v446, 111
      %v851 = vpop.permute.xlu0 %850
      %852 = vrot.lane.b32.xlu0 %v445, 111
      %v853 = vpop.permute.xlu0 %852
      %854 = vrot.lane.b32.xlu0 %v447, 111
      %v855 = vpop.permute.xlu0 %854
      %vm856 = vcmp.lt.s32.totalorder %v475, 111
      %v857 = vsel %vm856, %v849, %v853
      %v858 = vsel %vm856, %v851, %v855
      %v859 = vsel %vm856, %v853, %v849
      %v860 = vsel %vm856, %v855, %v851
      %v862 = vsel %vm481, %v456, 0
      %v865 = vsel %vm481, %v457, 0
      %867 = vmatprep.subr.mxu0 %v859
      %868 = vmatpush1.msra.mxu0 %v857
      %869 = vmatprep.subr.mxu0 %v860
      %870 = vmatpush1.msra.mxu0 %v858
      %871 = vmatprep.subr.mxu0 0.0
      %872 = vmatpush1.msra.mxu0 0.0
      %873 = vmatprep.subr.mxu0 0.0
      %874 = vmatpush1.msra.mxu0 0.0
      %875 = vmatprep.subr.mxu0 0.0
      %876 = vmatpush1.msra.mxu0 0.0
      %877 = vmatprep.subr.mxu0 0.0
      %878 = vmatpush1.msra.mxu0 0.0
      %879 = vmatprep.subr.mxu0 0.0
      %880 = vmatpush1.msra.mxu0 0.0
      %881 = vmatprep.subr.mxu0 0.0
      %882 = vmatpush1.msra.mxu0 0.0
      %883 = vmatprep.subr.mxu0 0.0
      %884 = vmatpush1.msra.mxu0 0.0
      %885 = vmatprep.subr.mxu0 0.0
      %886 = vmatpush1.msra.mxu0 0.0
      %887 = vmatprep.subr.mxu0 0.0
      %888 = vmatpush1.msra.mxu0 0.0
      %889 = vmatprep.subr.mxu0 0.0
      %890 = vmatpush1.msra.mxu0 0.0
      %891 = vmatprep.subr.mxu0 0.0
      %892 = vmatpush1.msra.mxu0 0.0
      %893 = vmatprep.subr.mxu0 0.0
      %894 = vmatpush1.msra.mxu0 0.0
      %895 = vmatprep.subr.mxu0 0.0
      %896 = vmatpush1.msra.mxu0 0.0
      %897 = vmatprep.subr.mxu0 0.0
      %898 = vmatpush1.msra.mxu0 0.0
      %899 = vmatprep.subr.mxu0 0.0
      %900 = vmatpush1.msra.mxu0 0.0
      %901 = vmatprep.subr.mxu0 0.0
      %902 = vmatpush1.msra.mxu0 0.0
      %903 = vmatprep.subr.mxu0 0.0
      %904 = vmatpush1.msra.mxu0 0.0
      %905 = vmatprep.subr.mxu0 0.0
      %906 = vmatpush1.msra.mxu0 0.0
      %907 = vmatprep.subr.mxu0 0.0
      %908 = vmatpush1.msra.mxu0 0.0
      %909 = vmatprep.subr.mxu0 0.0
      %910 = vmatpush1.msra.mxu0 0.0
      %911 = vmatprep.subr.mxu0 0.0
      %912 = vmatpush1.msra.mxu0 0.0
      %913 = vmatprep.subr.mxu0 0.0
      %914 = vmatpush1.msra.mxu0 0.0
      %915 = vmatprep.subr.mxu0 0.0
      %916 = vmatpush1.msra.mxu0 0.0
      %917 = vmatprep.subr.mxu0 0.0
      %918 = vmatpush1.msra.mxu0 0.0
      %919 = vmatprep.subr.mxu0 0.0
      %920 = vmatpush1.msra.mxu0 0.0
      %921 = vmatprep.subr.mxu0 0.0
      %922 = vmatpush1.msra.mxu0 0.0
      %923 = vmatprep.subr.mxu0 0.0
      %924 = vmatpush1.msra.mxu0 0.0
      %925 = vmatprep.subr.mxu0 0.0
      %926 = vmatpush1.msra.mxu0 0.0
      %927 = vmatprep.subr.mxu0 0.0
      %928 = vmatpush1.msra.mxu0 0.0
      %929 = vmatprep.subr.mxu0 0.0
      %930 = vmatpush1.msra.mxu0 0.0
      %931 = vmatprep.mubr.f32.mxu0 0.0
      %932 = vmatmul.mubr.f32.gmra.mrb[0].mxu0 %v862
      %v933 = vpop.f32.mrb[0].mxu0
      %v934 = vadd.f32 0.0, %v933
      %v935 = vpop.f32.mrb[0].mxu0
      %v936 = vadd.f32 0.0, %v935
      %937 = vmatprep.mubr.f32.mxu0 0.0
      %938 = vmatmul.mubr.f32.gmra.mrb[0].mxu0 %v865
      %v939 = vpop.f32.mrb[0].mxu0
      %v940 = vadd.f32 0.0, %v939
      %v941 = vpop.f32.mrb[0].mxu0
      %v942 = vadd.f32 0.0, %v941
      %943 = vdwg.mxu0
      %v944 = vadd.f32 %v844, %v934
      %v945 = vadd.f32 %v845, %v936
      %v946 = vadd.f32 %v846, %v940
      %v947 = vadd.f32 %v847, %v942
      %948 = vrot.lane.b32.xlu0 %v444, 110
      %v949 = vpop.permute.xlu0 %948
      %950 = vrot.lane.b32.xlu0 %v446, 110
      %v951 = vpop.permute.xlu0 %950
      %952 = vrot.lane.b32.xlu0 %v445, 110
      %v953 = vpop.permute.xlu0 %952
      %954 = vrot.lane.b32.xlu0 %v447, 110
      %v955 = vpop.permute.xlu0 %954
      %vm956 = vcmp.lt.s32.totalorder %v475, 110
      %v957 = vsel %vm956, %v949, %v953
      %v958 = vsel %vm956, %v951, %v955
      %v959 = vsel %vm956, %v953, %v949
      %v960 = vsel %vm956, %v955, %v951
      %v962 = vsel %vm481, %v458, 0
      %v965 = vsel %vm481, %v459, 0
      %967 = vmatprep.subr.mxu0 %v959
      %968 = vmatpush1.msra.mxu0 %v957
      %969 = vmatprep.subr.mxu0 %v960
      %970 = vmatpush1.msra.mxu0 %v958
      %971 = vmatprep.subr.mxu0 0.0
      %972 = vmatpush1.msra.mxu0 0.0
      %973 = vmatprep.subr.mxu0 0.0
      %974 = vmatpush1.msra.mxu0 0.0
      %975 = vmatprep.subr.mxu0 0.0
      %976 = vmatpush1.msra.mxu0 0.0
      %977 = vmatprep.subr.mxu0 0.0
      %978 = vmatpush1.msra.mxu0 0.0
      %979 = vmatprep.subr.mxu0 0.0
      %980 = vmatpush1.msra.mxu0 0.0
      %981 = vmatprep.subr.mxu0 0.0
      %982 = vmatpush1.msra.mxu0 0.0
      %983 = vmatprep.subr.mxu0 0.0
      %984 = vmatpush1.msra.mxu0 0.0
      %985 = vmatprep.subr.mxu0 0.0
      %986 = vmatpush1.msra.mxu0 0.0
      %987 = vmatprep.subr.mxu0 0.0
      %988 = vmatpush1.msra.mxu0 0.0
      %989 = vmatprep.subr.mxu0 0.0
      %990 = vmatpush1.msra.mxu0 0.0
      %991 = vmatprep.subr.mxu0 0.0
      %992 = vmatpush1.msra.mxu0 0.0
      %993 = vmatprep.subr.mxu0 0.0
      %994 = vmatpush1.msra.mxu0 0.0
      %995 = vmatprep.subr.mxu0 0.0
      %996 = vmatpush1.msra.mxu0 0.0
      %997 = vmatprep.subr.mxu0 0.0
      %998 = vmatpush1.msra.mxu0 0.0
      %999 = vmatprep.subr.mxu0 0.0
      %1000 = vmatpush1.msra.mxu0 0.0
      %1001 = vmatprep.subr.mxu0 0.0
      %1002 = vmatpush1.msra.mxu0 0.0
      %1003 = vmatprep.subr.mxu0 0.0
      %1004 = vmatpush1.msra.mxu0 0.0
      %1005 = vmatprep.subr.mxu0 0.0
      %1006 = vmatpush1.msra.mxu0 0.0
      %1007 = vmatprep.subr.mxu0 0.0
      %1008 = vmatpush1.msra.mxu0 0.0
      %1009 = vmatprep.subr.mxu0 0.0
      %1010 = vmatpush1.msra.mxu0 0.0
      %1011 = vmatprep.subr.mxu0 0.0
      %1012 = vmatpush1.msra.mxu0 0.0
      %1013 = vmatprep.subr.mxu0 0.0
      %1014 = vmatpush1.msra.mxu0 0.0
      %1015 = vmatprep.subr.mxu0 0.0
      %1016 = vmatpush1.msra.mxu0 0.0
      %1017 = vmatprep.subr.mxu0 0.0
      %1018 = vmatpush1.msra.mxu0 0.0
      %1019 = vmatprep.subr.mxu0 0.0
      %1020 = vmatpush1.msra.mxu0 0.0
      %1021 = vmatprep.subr.mxu0 0.0
      %1022 = vmatpush1.msra.mxu0 0.0
      %1023 = vmatprep.subr.mxu0 0.0
      %1024 = vmatpush1.msra.mxu0 0.0
      %1025 = vmatprep.subr.mxu0 0.0
      %1026 = vmatpush1.msra.mxu0 0.0
      %1027 = vmatprep.subr.mxu0 0.0
      %1028 = vmatpush1.msra.mxu0 0.0
      %1029 = vmatprep.subr.mxu0 0.0
      %1030 = vmatpush1.msra.mxu0 0.0
      %1031 = vmatprep.mubr.f32.mxu0 0.0
      %1032 = vmatmul.mubr.f32.gmra.mrb[0].mxu0 %v962
      %v1033 = vpop.f32.mrb[0].mxu0
      %v1034 = vadd.f32 0.0, %v1033
      %v1035 = vpop.f32.mrb[0].mxu0
      %v1036 = vadd.f32 0.0, %v1035
      %1037 = vmatprep.mubr.f32.mxu0 0.0
      %1038 = vmatmul.mubr.f32.gmra.mrb[0].mxu0 %v965
      %v1039 = vpop.f32.mrb[0].mxu0
      %v1040 = vadd.f32 0.0, %v1039
      %v1041 = vpop.f32.mrb[0].mxu0
      %v1042 = vadd.f32 0.0, %v1041
      %1043 = vdwg.mxu0
      %v1044 = vadd.f32 %v944, %v1034
      %v1045 = vadd.f32 %v945, %v1036
      %v1046 = vadd.f32 %v946, %v1040
      %v1047 = vadd.f32 %v947, %v1042
      %1048 = vrot.lane.b32.xlu0 %v444, 96
      %v1049 = vpop.permute.xlu0 %1048
      %1050 = vrot.lane.b32.xlu0 %v446, 96
      %v1051 = vpop.permute.xlu0 %1050
      %1052 = vrot.lane.b32.xlu0 %v445, 96
      %v1053 = vpop.permute.xlu0 %1052
      %1054 = vrot.lane.b32.xlu0 %v447, 96
      %v1055 = vpop.permute.xlu0 %1054
      %vm1056 = vcmp.lt.s32.totalorder %v475, 96
      %v1057 = vsel %vm1056, %v1049, %v1053
      %v1058 = vsel %vm1056, %v1051, %v1055
      %v1059 = vsel %vm1056, %v1053, %v1049
      %v1060 = vsel %vm1056, %v1055, %v1051
      %v1062 = vsel %vm481, %v460, 0
      %v1065 = vsel %vm481, %v461, 0
      %1067 = vmatprep.subr.mxu0 %v1059
      %1068 = vmatpush1.msra.mxu0 %v1057
      %1069 = vmatprep.subr.mxu0 %v1060
      %1070 = vmatpush1.msra.mxu0 %v1058
      %1071 = vmatprep.subr.mxu0 0.0
      %1072 = vmatpush1.msra.mxu0 0.0
      %1073 = vmatprep.subr.mxu0 0.0
      %1074 = vmatpush1.msra.mxu0 0.0
      %1075 = vmatprep.subr.mxu0 0.0
      %1076 = vmatpush1.msra.mxu0 0.0
      %1077 = vmatprep.subr.mxu0 0.0
      %1078 = vmatpush1.msra.mxu0 0.0
      %1079 = vmatprep.subr.mxu0 0.0
      %1080 = vmatpush1.msra.mxu0 0.0
      %1081 = vmatprep.subr.mxu0 0.0
      %1082 = vmatpush1.msra.mxu0 0.0
      %1083 = vmatprep.subr.mxu0 0.0
      %1084 = vmatpush1.msra.mxu0 0.0
      %1085 = vmatprep.subr.mxu0 0.0
      %1086 = vmatpush1.msra.mxu0 0.0
      %1087 = vmatprep.subr.mxu0 0.0
      %1088 = vmatpush1.msra.mxu0 0.0
      %1089 = vmatprep.subr.mxu0 0.0
      %1090 = vmatpush1.msra.mxu0 0.0
      %1091 = vmatprep.subr.mxu0 0.0
      %1092 = vmatpush1.msra.mxu0 0.0
      %1093 = vmatprep.subr.mxu0 0.0
      %1094 = vmatpush1.msra.mxu0 0.0
      %1095 = vmatprep.subr.mxu0 0.0
      %1096 = vmatpush1.msra.mxu0 0.0
      %1097 = vmatprep.subr.mxu0 0.0
      %1098 = vmatpush1.msra.mxu0 0.0
      %1099 = vmatprep.subr.mxu0 0.0
      %1100 = vmatpush1.msra.mxu0 0.0
      %1101 = vmatprep.subr.mxu0 0.0
      %1102 = vmatpush1.msra.mxu0 0.0
      %1103 = vmatprep.subr.mxu0 0.0
      %1104 = vmatpush1.msra.mxu0 0.0
      %1105 = vmatprep.subr.mxu0 0.0
      %1106 = vmatpush1.msra.mxu0 0.0
      %1107 = vmatprep.subr.mxu0 0.0
      %1108 = vmatpush1.msra.mxu0 0.0
      %1109 = vmatprep.subr.mxu0 0.0
      %1110 = vmatpush1.msra.mxu0 0.0
      %1111 = vmatprep.subr.mxu0 0.0
      %1112 = vmatpush1.msra.mxu0 0.0
      %1113 = vmatprep.subr.mxu0 0.0
      %1114 = vmatpush1.msra.mxu0 0.0
      %1115 = vmatprep.subr.mxu0 0.0
      %1116 = vmatpush1.msra.mxu0 0.0
      %1117 = vmatprep.subr.mxu0 0.0
      %1118 = vmatpush1.msra.mxu0 0.0
      %1119 = vmatprep.subr.mxu0 0.0
      %1120 = vmatpush1.msra.mxu0 0.0
      %1121 = vmatprep.subr.mxu0 0.0
      %1122 = vmatpush1.msra.mxu0 0.0
      %1123 = vmatprep.subr.mxu0 0.0
      %1124 = vmatpush1.msra.mxu0 0.0
      %1125 = vmatprep.subr.mxu0 0.0
      %1126 = vmatpush1.msra.mxu0 0.0
      %1127 = vmatprep.subr.mxu0 0.0
      %1128 = vmatpush1.msra.mxu0 0.0
      %1129 = vmatprep.subr.mxu0 0.0
      %1130 = vmatpush1.msra.mxu0 0.0
      %1131 = vmatprep.mubr.f32.mxu0 0.0
      %1132 = vmatmul.mubr.f32.gmra.mrb[0].mxu0 %v1062
      %v1133 = vpop.f32.mrb[0].mxu0
      %v1134 = vadd.f32 0.0, %v1133
      %v1135 = vpop.f32.mrb[0].mxu0
      %v1136 = vadd.f32 0.0, %v1135
      %1137 = vmatprep.mubr.f32.mxu0 0.0
      %1138 = vmatmul.mubr.f32.gmra.mrb[0].mxu0 %v1065
      %v1139 = vpop.f32.mrb[0].mxu0
      %v1140 = vadd.f32 0.0, %v1139
      %v1141 = vpop.f32.mrb[0].mxu0
      %v1142 = vadd.f32 0.0, %v1141
      %1143 = vdwg.mxu0
      %v1144 = vadd.f32 %v1044, %v1134
      %v1145 = vadd.f32 %v1045, %v1136
      %v1146 = vadd.f32 %v1046, %v1140
      %v1147 = vadd.f32 %v1047, %v1142
      %1148 = vrot.lane.b32.xlu0 %v444, 95
      %v1149 = vpop.permute.xlu0 %1148
      %1150 = vrot.lane.b32.xlu0 %v446, 95
      %v1151 = vpop.permute.xlu0 %1150
      %1152 = vrot.lane.b32.xlu0 %v445, 95
      %v1153 = vpop.permute.xlu0 %1152
      %1154 = vrot.lane.b32.xlu0 %v447, 95
      %v1155 = vpop.permute.xlu0 %1154
      %vm1156 = vcmp.lt.s32.totalorder %v475, 95
      %v1157 = vsel %vm1156, %v1149, %v1153
      %v1158 = vsel %vm1156, %v1151, %v1155
      %v1159 = vsel %vm1156, %v1153, %v1149
      %v1160 = vsel %vm1156, %v1155, %v1151
      %v1162 = vsel %vm481, %v462, 0
      %v1165 = vsel %vm481, %v463, 0
      %1167 = vmatprep.subr.mxu0 %v1159
      %1168 = vmatpush1.msra.mxu0 %v1157
      %1169 = vmatprep.subr.mxu0 %v1160
      %1170 = vmatpush1.msra.mxu0 %v1158
      %1171 = vmatprep.subr.mxu0 0.0
      %1172 = vmatpush1.msra.mxu0 0.0
      %1173 = vmatprep.subr.mxu0 0.0
      %1174 = vmatpush1.msra.mxu0 0.0
      %1175 = vmatprep.subr.mxu0 0.0
      %1176 = vmatpush1.msra.mxu0 0.0
      %1177 = vmatprep.subr.mxu0 0.0
      %1178 = vmatpush1.msra.mxu0 0.0
      %1179 = vmatprep.subr.mxu0 0.0
      %1180 = vmatpush1.msra.mxu0 0.0
      %1181 = vmatprep.subr.mxu0 0.0
      %1182 = vmatpush1.msra.mxu0 0.0
      %1183 = vmatprep.subr.mxu0 0.0
      %1184 = vmatpush1.msra.mxu0 0.0
      %1185 = vmatprep.subr.mxu0 0.0
      %1186 = vmatpush1.msra.mxu0 0.0
      %1187 = vmatprep.subr.mxu0 0.0
      %1188 = vmatpush1.msra.mxu0 0.0
      %1189 = vmatprep.subr.mxu0 0.0
      %1190 = vmatpush1.msra.mxu0 0.0
      %1191 = vmatprep.subr.mxu0 0.0
      %1192 = vmatpush1.msra.mxu0 0.0
      %1193 = vmatprep.subr.mxu0 0.0
      %1194 = vmatpush1.msra.mxu0 0.0
      %1195 = vmatprep.subr.mxu0 0.0
      %1196 = vmatpush1.msra.mxu0 0.0
      %1197 = vmatprep.subr.mxu0 0.0
      %1198 = vmatpush1.msra.mxu0 0.0
      %1199 = vmatprep.subr.mxu0 0.0
      %1200 = vmatpush1.msra.mxu0 0.0
      %1201 = vmatprep.subr.mxu0 0.0
      %1202 = vmatpush1.msra.mxu0 0.0
      %1203 = vmatprep.subr.mxu0 0.0
      %1204 = vmatpush1.msra.mxu0 0.0
      %1205 = vmatprep.subr.mxu0 0.0
      %1206 = vmatpush1.msra.mxu0 0.0
      %1207 = vmatprep.subr.mxu0 0.0
      %1208 = vmatpush1.msra.mxu0 0.0
      %1209 = vmatprep.subr.mxu0 0.0
      %1210 = vmatpush1.msra.mxu0 0.0
      %1211 = vmatprep.subr.mxu0 0.0
      %1212 = vmatpush1.msra.mxu0 0.0
      %1213 = vmatprep.subr.mxu0 0.0
      %1214 = vmatpush1.msra.mxu0 0.0
      %1215 = vmatprep.subr.mxu0 0.0
      %1216 = vmatpush1.msra.mxu0 0.0
      %1217 = vmatprep.subr.mxu0 0.0
      %1218 = vmatpush1.msra.mxu0 0.0
      %1219 = vmatprep.subr.mxu0 0.0
      %1220 = vmatpush1.msra.mxu0 0.0
      %1221 = vmatprep.subr.mxu0 0.0
      %1222 = vmatpush1.msra.mxu0 0.0
      %1223 = vmatprep.subr.mxu0 0.0
      %1224 = vmatpush1.msra.mxu0 0.0
      %1225 = vmatprep.subr.mxu0 0.0
      %1226 = vmatpush1.msra.mxu0 0.0
      %1227 = vmatprep.subr.mxu0 0.0
      %1228 = vmatpush1.msra.mxu0 0.0
      %1229 = vmatprep.subr.mxu0 0.0
      %1230 = vmatpush1.msra.mxu0 0.0
      %1231 = vmatprep.mubr.f32.mxu0 0.0
      %1232 = vmatmul.mubr.f32.gmra.mrb[0].mxu0 %v1162
      %v1233 = vpop.f32.mrb[0].mxu0
      %v1234 = vadd.f32 0.0, %v1233
      %v1235 = vpop.f32.mrb[0].mxu0
      %v1236 = vadd.f32 0.0, %v1235
      %1237 = vmatprep.mubr.f32.mxu0 0.0
      %1238 = vmatmul.mubr.f32.gmra.mrb[0].mxu0 %v1165
      %v1239 = vpop.f32.mrb[0].mxu0
      %v1240 = vadd.f32 0.0, %v1239
      %v1241 = vpop.f32.mrb[0].mxu0
      %v1242 = vadd.f32 0.0, %v1241
      %1243 = vdwg.mxu0
      %v1244 = vadd.f32 %v1144, %v1234
      %v1245 = vadd.f32 %v1145, %v1236
      %v1246 = vadd.f32 %v1146, %v1240
      %v1247 = vadd.f32 %v1147, %v1242
      %1248 = vrot.lane.b32.xlu0 %v444, 94
      %v1249 = vpop.permute.xlu0 %1248
      %1250 = vrot.lane.b32.xlu0 %v446, 94
      %v1251 = vpop.permute.xlu0 %1250
      %1252 = vrot.lane.b32.xlu0 %v445, 94
      %v1253 = vpop.permute.xlu0 %1252
      %1254 = vrot.lane.b32.xlu0 %v447, 94
      %v1255 = vpop.permute.xlu0 %1254
      %vm1256 = vcmp.lt.s32.totalorder %v475, 94
      %v1257 = vsel %vm1256, %v1249, %v1253
      %v1258 = vsel %vm1256, %v1251, %v1255
      %v1259 = vsel %vm1256, %v1253, %v1249
      %v1260 = vsel %vm1256, %v1255, %v1251
      %v1262 = vsel %vm481, %v464, 0
      %v1265 = vsel %vm481, %v465, 0
      %1267 = vmatprep.subr.mxu0 %v1259
      %1268 = vmatpush1.msra.mxu0 %v1257
      %1269 = vmatprep.subr.mxu0 %v1260
      %1270 = vmatpush1.msra.mxu0 %v1258
      %1271 = vmatprep.subr.mxu0 0.0
      %1272 = vmatpush1.msra.mxu0 0.0
      %1273 = vmatprep.subr.mxu0 0.0
      %1274 = vmatpush1.msra.mxu0 0.0
      %1275 = vmatprep.subr.mxu0 0.0
      %1276 = vmatpush1.msra.mxu0 0.0
      %1277 = vmatprep.subr.mxu0 0.0
      %1278 = vmatpush1.msra.mxu0 0.0
      %1279 = vmatprep.subr.mxu0 0.0
      %1280 = vmatpush1.msra.mxu0 0.0
      %1281 = vmatprep.subr.mxu0 0.0
      %1282 = vmatpush1.msra.mxu0 0.0
      %1283 = vmatprep.subr.mxu0 0.0
      %1284 = vmatpush1.msra.mxu0 0.0
      %1285 = vmatprep.subr.mxu0 0.0
      %1286 = vmatpush1.msra.mxu0 0.0
      %1287 = vmatprep.subr.mxu0 0.0
      %1288 = vmatpush1.msra.mxu0 0.0
      %1289 = vmatprep.subr.mxu0 0.0
      %1290 = vmatpush1.msra.mxu0 0.0
      %1291 = vmatprep.subr.mxu0 0.0
      %1292 = vmatpush1.msra.mxu0 0.0
      %1293 = vmatprep.subr.mxu0 0.0
      %1294 = vmatpush1.msra.mxu0 0.0
      %1295 = vmatprep.subr.mxu0 0.0
      %1296 = vmatpush1.msra.mxu0 0.0
      %1297 = vmatprep.subr.mxu0 0.0
      %1298 = vmatpush1.msra.mxu0 0.0
      %1299 = vmatprep.subr.mxu0 0.0
      %1300 = vmatpush1.msra.mxu0 0.0
      %1301 = vmatprep.subr.mxu0 0.0
      %1302 = vmatpush1.msra.mxu0 0.0
      %1303 = vmatprep.subr.mxu0 0.0
      %1304 = vmatpush1.msra.mxu0 0.0
      %1305 = vmatprep.subr.mxu0 0.0
      %1306 = vmatpush1.msra.mxu0 0.0
      %1307 = vmatprep.subr.mxu0 0.0
      %1308 = vmatpush1.msra.mxu0 0.0
      %1309 = vmatprep.subr.mxu0 0.0
      %1310 = vmatpush1.msra.mxu0 0.0
      %1311 = vmatprep.subr.mxu0 0.0
      %1312 = vmatpush1.msra.mxu0 0.0
      %1313 = vmatprep.subr.mxu0 0.0
      %1314 = vmatpush1.msra.mxu0 0.0
      %1315 = vmatprep.subr.mxu0 0.0
      %1316 = vmatpush1.msra.mxu0 0.0
      %1317 = vmatprep.subr.mxu0 0.0
      %1318 = vmatpush1.msra.mxu0 0.0
      %1319 = vmatprep.subr.mxu0 0.0
      %1320 = vmatpush1.msra.mxu0 0.0
      %1321 = vmatprep.subr.mxu0 0.0
      %1322 = vmatpush1.msra.mxu0 0.0
      %1323 = vmatprep.subr.mxu0 0.0
      %1324 = vmatpush1.msra.mxu0 0.0
      %1325 = vmatprep.subr.mxu0 0.0
      %1326 = vmatpush1.msra.mxu0 0.0
      %1327 = vmatprep.subr.mxu0 0.0
      %1328 = vmatpush1.msra.mxu0 0.0
      %1329 = vmatprep.subr.mxu0 0.0
      %1330 = vmatpush1.msra.mxu0 0.0
      %1331 = vmatprep.mubr.f32.mxu0 0.0
      %1332 = vmatmul.mubr.f32.gmra.mrb[0].mxu0 %v1262
      %v1333 = vpop.f32.mrb[0].mxu0
      %v1334 = vadd.f32 0.0, %v1333
      %v1335 = vpop.f32.mrb[0].mxu0
      %v1336 = vadd.f32 0.0, %v1335
      %1337 = vmatprep.mubr.f32.mxu0 0.0
      %1338 = vmatmul.mubr.f32.gmra.mrb[0].mxu0 %v1265
      %v1339 = vpop.f32.mrb[0].mxu0
      %v1340 = vadd.f32 0.0, %v1339
      %v1341 = vpop.f32.mrb[0].mxu0
      %v1342 = vadd.f32 0.0, %v1341
      %1343 = vdwg.mxu0
      %v1344 = vadd.f32 %v1244, %v1334
      %v1345 = vadd.f32 %v1245, %v1336
      %v1346 = vadd.f32 %v1246, %v1340
      %v1347 = vadd.f32 %v1247, %v1342
      %v1348 = vld [vmem:[%s4] sm:$0xff]
      %v1349 = vld [vmem:[%s4 + $0x8] sm:$0xff]
      %1351 = vset.pattern.permute.xlu0 0
      %1352 = vperm.xlu0 %1351, %v1348
      %v1353 = vpop.permute.xlu0 %1352
      %1356 = vset.pattern.permute.xlu0 0
      %1357 = vperm.xlu0 %1356, %v1349
      %v1358 = vpop.permute.xlu0 %1357
      %v1360 = vadd.f32 %v1344, %v1353
      %v1361 = vadd.f32 %v1345, %v1353
      %v1362 = vadd.f32 %v1346, %v1358
      %v1363 = vadd.f32 %v1347, %v1358
      %vm1364 = vcmp.gt.f32.partialorder %v1360, 0.0
      %vm1365 = vcmp.gt.f32.partialorder %v1361, 0.0
      %vm1366 = vcmp.gt.f32.partialorder %v1362, 0.0
      %vm1367 = vcmp.gt.f32.partialorder %v1363, 0.0
      %v1368 = vmul.f32 %v1360, 1.442695
      %v1369 = vpow.pop %v1368
      %v1370 = vmul.f32 %v1361, 1.442695
      %v1371 = vpow.pop %v1370
      %v1372 = vmul.f32 %v1362, 1.442695
      %v1373 = vpow.pop %v1372
      %v1374 = vmul.f32 %v1363, 1.442695
      %v1375 = vpow.pop %v1374
      %v1376 = vsub.f32 %v1369, 1.0
      %v1377 = vsub.f32 %v1371, 1.0
      %v1378 = vsub.f32 %v1373, 1.0
      %v1379 = vsub.f32 %v1375, 1.0
      %v1380 = vsel %vm1364, %v1360, %v1376
      %v1381 = vsel %vm1365, %v1361, %v1377
      %v1382 = vsel %vm1366, %v1362, %v1378
      %v1383 = vsel %vm1367, %v1363, %v1379
      %v1384 = vld [vmem:[%s5] sm:$0xff]
      %v1385 = vld [vmem:[%s5 + $0x8] sm:$0xff]
      %v1386 = vld [vmem:[%s5 + $0x10] sm:$0xff]
      %v1387 = vld [vmem:[%s5 + $0x18] sm:$0xff]
      %v1388 = vld [vmem:[%s5 + $0x20] sm:$0xff]
      %v1389 = vld [vmem:[%s5 + $0x28] sm:$0xff]
      %v1390 = vld [vmem:[%s5 + $0x30] sm:$0xff]
      %v1391 = vld [vmem:[%s5 + $0x38] sm:$0xff]
      %v1392 = vld [vmem:[%s5 + $0x40] sm:$0xff]
      %v1393 = vld [vmem:[%s5 + $0x48] sm:$0xff]
      %v1394 = vld [vmem:[%s5 + $0x50] sm:$0xff]
      %v1395 = vld [vmem:[%s5 + $0x58] sm:$0xff]
      %v1396 = vld [vmem:[%s5 + $0x60] sm:$0xff]
      %v1397 = vld [vmem:[%s5 + $0x68] sm:$0xff]
      %v1398 = vld [vmem:[%s5 + $0x70] sm:$0xff]
      %v1399 = vld [vmem:[%s5 + $0x78] sm:$0xff]
      %v1400 = vld [vmem:[%s5 + $0x80] sm:$0xff]
      %v1401 = vld [vmem:[%s5 + $0x88] sm:$0xff]
      %v1402 = vld [vmem:[%s5 + $0x90] sm:$0xff]
      %v1403 = vld [vmem:[%s5 + $0x98] sm:$0xff]
      %v1404 = vld [vmem:[%s5 + $0xa0] sm:$0xff]
      %v1405 = vld [vmem:[%s5 + $0xa8] sm:$0xff]
      %v1406 = vld [vmem:[%s5 + $0xb0] sm:$0xff]
      %v1407 = vld [vmem:[%s5 + $0xb8] sm:$0xff]
      %v1408 = vld [vmem:[%s5 + $0xc0] sm:$0xff]
      %v1409 = vld [vmem:[%s5 + $0xc8] sm:$0xff]
      %v1410 = vld [vmem:[%s5 + $0xd0] sm:$0xff]
      %v1411 = vld [vmem:[%s5 + $0xd8] sm:$0xff]
      %v1412 = vld [vmem:[%s5 + $0xe0] sm:$0xff]
      %v1413 = vld [vmem:[%s5 + $0xe8] sm:$0xff]
      %v1414 = vld [vmem:[%s5 + $0xf0] sm:$0xff]
      %v1415 = vld [vmem:[%s5 + $0xf8] sm:$0xff]
      %v1416 = vld [vmem:[%s5 + $0x100] sm:$0xff]
      %v1417 = vld [vmem:[%s5 + $0x108] sm:$0xff]
      %v1418 = vld [vmem:[%s5 + $0x110] sm:$0xff]
      %v1419 = vld [vmem:[%s5 + $0x118] sm:$0xff]
      %1420 = vrot.lane.b32.xlu0 %v1380, 127
      %v1421 = vpop.permute.xlu0 %1420
      %1422 = vrot.lane.b32.xlu0 %v1382, 127
      %v1423 = vpop.permute.xlu0 %1422
      %1424 = vrot.lane.b32.xlu0 %v1381, 127
      %v1425 = vpop.permute.xlu0 %1424
      %1426 = vrot.lane.b32.xlu0 %v1383, 127
      %v1427 = vpop.permute.xlu0 %1426
      %v1428 = vsel %vm476, %v1421, %v1425
      %v1429 = vsel %vm476, %v1423, %v1427
      %v1430 = vsel %vm476, %v1425, %v1421
      %v1431 = vsel %vm476, %v1427, %v1423
      %v1433 = vsel %vm481, %v1388, 0
      %v1436 = vsel %vm481, %v1389, 0
      %v1439 = vsel %vm481, %v1390, 0
      %v1442 = vsel %vm481, %v1391, 0
      %1444 = vmatprep.subr.mxu0 %v1430
      %1445 = vmatpush1.msra.mxu0 %v1428
      %1446 = vmatprep.subr.mxu0 %v1431
      %1447 = vmatpush1.msra.mxu0 %v1429
      %1448 = vmatprep.subr.mxu0 0.0
      %1449 = vmatpush1.msra.mxu0 0.0
      %1450 = vmatprep.subr.mxu0 0.0
      %1451 = vmatpush1.msra.mxu0 0.0
      %1452 = vmatprep.subr.mxu0 0.0
      %1453 = vmatpush1.msra.mxu0 0.0
      %1454 = vmatprep.subr.mxu0 0.0
      %1455 = vmatpush1.msra.mxu0 0.0
      %1456 = vmatprep.subr.mxu0 0.0
      %1457 = vmatpush1.msra.mxu0 0.0
      %1458 = vmatprep.subr.mxu0 0.0
      %1459 = vmatpush1.msra.mxu0 0.0
      %1460 = vmatprep.subr.mxu0 0.0
      %1461 = vmatpush1.msra.mxu0 0.0
      %1462 = vmatprep.subr.mxu0 0.0
      %1463 = vmatpush1.msra.mxu0 0.0
      %1464 = vmatprep.subr.mxu0 0.0
      %1465 = vmatpush1.msra.mxu0 0.0
      %1466 = vmatprep.subr.mxu0 0.0
      %1467 = vmatpush1.msra.mxu0 0.0
      %1468 = vmatprep.subr.mxu0 0.0
      %1469 = vmatpush1.msra.mxu0 0.0
      %1470 = vmatprep.subr.mxu0 0.0
      %1471 = vmatpush1.msra.mxu0 0.0
      %1472 = vmatprep.subr.mxu0 0.0
      %1473 = vmatpush1.msra.mxu0 0.0
      %1474 = vmatprep.subr.mxu0 0.0
      %1475 = vmatpush1.msra.mxu0 0.0
      %1476 = vmatprep.subr.mxu0 0.0
      %1477 = vmatpush1.msra.mxu0 0.0
      %1478 = vmatprep.subr.mxu0 0.0
      %1479 = vmatpush1.msra.mxu0 0.0
      %1480 = vmatprep.subr.mxu0 0.0
      %1481 = vmatpush1.msra.mxu0 0.0
      %1482 = vmatprep.subr.mxu0 0.0
      %1483 = vmatpush1.msra.mxu0 0.0
      %1484 = vmatprep.subr.mxu0 0.0
      %1485 = vmatpush1.msra.mxu0 0.0
      %1486 = vmatprep.subr.mxu0 0.0
      %1487 = vmatpush1.msra.mxu0 0.0
      %1488 = vmatprep.subr.mxu0 0.0
      %1489 = vmatpush1.msra.mxu0 0.0
      %1490 = vmatprep.subr.mxu0 0.0
      %1491 = vmatpush1.msra.mxu0 0.0
      %1492 = vmatprep.subr.mxu0 0.0
      %1493 = vmatpush1.msra.mxu0 0.0
      %1494 = vmatprep.subr.mxu0 0.0
      %1495 = vmatpush1.msra.mxu0 0.0
      %1496 = vmatprep.subr.mxu0 0.0
      %1497 = vmatpush1.msra.mxu0 0.0
      %1498 = vmatprep.subr.mxu0 0.0
      %1499 = vmatpush1.msra.mxu0 0.0
      %1500 = vmatprep.subr.mxu0 0.0
      %1501 = vmatpush1.msra.mxu0 0.0
      %1502 = vmatprep.subr.mxu0 0.0
      %1503 = vmatpush1.msra.mxu0 0.0
      %1504 = vmatprep.subr.mxu0 0.0
      %1505 = vmatpush1.msra.mxu0 0.0
      %1506 = vmatprep.subr.mxu0 0.0
      %1507 = vmatpush1.msra.mxu0 0.0
      %1508 = vmatprep.mubr.f32.mxu0 0.0
      %1509 = vmatmul.mubr.f32.gmra.mrb[0].mxu0 %v1433
      %v1510 = vpop.f32.mrb[0].mxu0
      %v1511 = vadd.f32 0.0, %v1510
      %v1512 = vpop.f32.mrb[0].mxu0
      %v1513 = vadd.f32 0.0, %v1512
      %1514 = vmatprep.mubr.f32.mxu0 0.0
      %1515 = vmatmul.mubr.f32.gmra.mrb[0].mxu0 %v1436
      %v1516 = vpop.f32.mrb[0].mxu0
      %v1517 = vadd.f32 0.0, %v1516
      %v1518 = vpop.f32.mrb[0].mxu0
      %v1519 = vadd.f32 0.0, %v1518
      %1520 = vmatprep.mubr.f32.mxu0 0.0
      %1521 = vmatmul.mubr.f32.gmra.mrb[0].mxu0 %v1439
      %v1522 = vpop.f32.mrb[0].mxu0
      %v1523 = vadd.f32 0.0, %v1522
      %v1524 = vpop.f32.mrb[0].mxu0
      %v1525 = vadd.f32 0.0, %v1524
      %1526 = vmatprep.mubr.f32.mxu0 0.0
      %1527 = vmatmul.mubr.f32.gmra.mrb[0].mxu0 %v1442
      %v1528 = vpop.f32.mrb[0].mxu0
      %v1529 = vadd.f32 0.0, %v1528
      %v1530 = vpop.f32.mrb[0].mxu0
      %v1531 = vadd.f32 0.0, %v1530
      %1532 = vdwg.mxu0
      %v1534 = vsel %vm481, %v1384, 0
      %v1537 = vsel %vm481, %v1385, 0
      %v1540 = vsel %vm481, %v1386, 0
      %v1543 = vsel %vm481, %v1387, 0
      %1545 = vmatprep.subr.mxu0 %v1381
      %1546 = vmatpush1.msra.mxu0 %v1380
      %1547 = vmatprep.subr.mxu0 %v1383
      %1548 = vmatpush1.msra.mxu0 %v1382
      %1549 = vmatprep.subr.mxu0 0.0
      %1550 = vmatpush1.msra.mxu0 0.0
      %1551 = vmatprep.subr.mxu0 0.0
      %1552 = vmatpush1.msra.mxu0 0.0
      %1553 = vmatprep.subr.mxu0 0.0
      %1554 = vmatpush1.msra.mxu0 0.0
      %1555 = vmatprep.subr.mxu0 0.0
      %1556 = vmatpush1.msra.mxu0 0.0
      %1557 = vmatprep.subr.mxu0 0.0
      %1558 = vmatpush1.msra.mxu0 0.0
      %1559 = vmatprep.subr.mxu0 0.0
      %1560 = vmatpush1.msra.mxu0 0.0
      %1561 = vmatprep.subr.mxu0 0.0
      %1562 = vmatpush1.msra.mxu0 0.0
      %1563 = vmatprep.subr.mxu0 0.0
      %1564 = vmatpush1.msra.mxu0 0.0
      %1565 = vmatprep.subr.mxu0 0.0
      %1566 = vmatpush1.msra.mxu0 0.0
      %1567 = vmatprep.subr.mxu0 0.0
      %1568 = vmatpush1.msra.mxu0 0.0
      %1569 = vmatprep.subr.mxu0 0.0
      %1570 = vmatpush1.msra.mxu0 0.0
      %1571 = vmatprep.subr.mxu0 0.0
      %1572 = vmatpush1.msra.mxu0 0.0
      %1573 = vmatprep.subr.mxu0 0.0
      %1574 = vmatpush1.msra.mxu0 0.0
      %1575 = vmatprep.subr.mxu0 0.0
      %1576 = vmatpush1.msra.mxu0 0.0
      %1577 = vmatprep.subr.mxu0 0.0
      %1578 = vmatpush1.msra.mxu0 0.0
      %1579 = vmatprep.subr.mxu0 0.0
      %1580 = vmatpush1.msra.mxu0 0.0
      %1581 = vmatprep.subr.mxu0 0.0
      %1582 = vmatpush1.msra.mxu0 0.0
      %1583 = vmatprep.subr.mxu0 0.0
      %1584 = vmatpush1.msra.mxu0 0.0
      %1585 = vmatprep.subr.mxu0 0.0
      %1586 = vmatpush1.msra.mxu0 0.0
      %1587 = vmatprep.subr.mxu0 0.0
      %1588 = vmatpush1.msra.mxu0 0.0
      %1589 = vmatprep.subr.mxu0 0.0
      %1590 = vmatpush1.msra.mxu0 0.0
      %1591 = vmatprep.subr.mxu0 0.0
      %1592 = vmatpush1.msra.mxu0 0.0
      %1593 = vmatprep.subr.mxu0 0.0
      %1594 = vmatpush1.msra.mxu0 0.0
      %1595 = vmatprep.subr.mxu0 0.0
      %1596 = vmatpush1.msra.mxu0 0.0
      %1597 = vmatprep.subr.mxu0 0.0
      %1598 = vmatpush1.msra.mxu0 0.0
      %1599 = vmatprep.subr.mxu0 0.0
      %1600 = vmatpush1.msra.mxu0 0.0
      %1601 = vmatprep.subr.mxu0 0.0
      %1602 = vmatpush1.msra.mxu0 0.0
      %1603 = vmatprep.subr.mxu0 0.0
      %1604 = vmatpush1.msra.mxu0 0.0
      %1605 = vmatprep.subr.mxu0 0.0
      %1606 = vmatpush1.msra.mxu0 0.0
      %1607 = vmatprep.subr.mxu0 0.0
      %1608 = vmatpush1.msra.mxu0 0.0
      %1609 = vmatprep.mubr.f32.mxu0 0.0
      %1610 = vmatmul.mubr.f32.gmra.mrb[0].mxu0 %v1534
      %v1611 = vpop.f32.mrb[0].mxu0
      %v1612 = vadd.f32 %v1511, %v1611
      %v1613 = vpop.f32.mrb[0].mxu0
      %v1614 = vadd.f32 %v1513, %v1613
      %1615 = vmatprep.mubr.f32.mxu0 0.0
      %1616 = vmatmul.mubr.f32.gmra.mrb[0].mxu0 %v1537
      %v1617 = vpop.f32.mrb[0].mxu0
      %v1618 = vadd.f32 %v1517, %v1617
      %v1619 = vpop.f32.mrb[0].mxu0
      %v1620 = vadd.f32 %v1519, %v1619
      %1621 = vmatprep.mubr.f32.mxu0 0.0
      %1622 = vmatmul.mubr.f32.gmra.mrb[0].mxu0 %v1540
      %v1623 = vpop.f32.mrb[0].mxu0
      %v1624 = vadd.f32 %v1523, %v1623
      %v1625 = vpop.f32.mrb[0].mxu0
      %v1626 = vadd.f32 %v1525, %v1625
      %1627 = vmatprep.mubr.f32.mxu0 0.0
      %1628 = vmatmul.mubr.f32.gmra.mrb[0].mxu0 %v1543
      %v1629 = vpop.f32.mrb[0].mxu0
      %v1630 = vadd.f32 %v1529, %v1629
      %v1631 = vpop.f32.mrb[0].mxu0
      %v1632 = vadd.f32 %v1531, %v1631
      %1633 = vdwg.mxu0
      %1634 = vrot.lane.b32.xlu0 %v1380, 126
      %v1635 = vpop.permute.xlu0 %1634
      %1636 = vrot.lane.b32.xlu0 %v1382, 126
      %v1637 = vpop.permute.xlu0 %1636
      %1638 = vrot.lane.b32.xlu0 %v1381, 126
      %v1639 = vpop.permute.xlu0 %1638
      %1640 = vrot.lane.b32.xlu0 %v1383, 126
      %v1641 = vpop.permute.xlu0 %1640
      %v1642 = vsel %vm656, %v1635, %v1639
      %v1643 = vsel %vm656, %v1637, %v1641
      %v1644 = vsel %vm656, %v1639, %v1635
      %v1645 = vsel %vm656, %v1641, %v1637
      %v1647 = vsel %vm481, %v1392, 0
      %v1650 = vsel %vm481, %v1393, 0
      %v1653 = vsel %vm481, %v1394, 0
      %v1656 = vsel %vm481, %v1395, 0
      %1658 = vmatprep.subr.mxu0 %v1644
      %1659 = vmatpush1.msra.mxu0 %v1642
      %1660 = vmatprep.subr.mxu0 %v1645
      %1661 = vmatpush1.msra.mxu0 %v1643
      %1662 = vmatprep.subr.mxu0 0.0
      %1663 = vmatpush1.msra.mxu0 0.0
      %1664 = vmatprep.subr.mxu0 0.0
      %1665 = vmatpush1.msra.mxu0 0.0
      %1666 = vmatprep.subr.mxu0 0.0
      %1667 = vmatpush1.msra.mxu0 0.0
      %1668 = vmatprep.subr.mxu0 0.0
      %1669 = vmatpush1.msra.mxu0 0.0
      %1670 = vmatprep.subr.mxu0 0.0
      %1671 = vmatpush1.msra.mxu0 0.0
      %1672 = vmatprep.subr.mxu0 0.0
      %1673 = vmatpush1.msra.mxu0 0.0
      %1674 = vmatprep.subr.mxu0 0.0
      %1675 = vmatpush1.msra.mxu0 0.0
      %1676 = vmatprep.subr.mxu0 0.0
      %1677 = vmatpush1.msra.mxu0 0.0
      %1678 = vmatprep.subr.mxu0 0.0
      %1679 = vmatpush1.msra.mxu0 0.0
      %1680 = vmatprep.subr.mxu0 0.0
      %1681 = vmatpush1.msra.mxu0 0.0
      %1682 = vmatprep.subr.mxu0 0.0
      %1683 = vmatpush1.msra.mxu0 0.0
      %1684 = vmatprep.subr.mxu0 0.0
      %1685 = vmatpush1.msra.mxu0 0.0
      %1686 = vmatprep.subr.mxu0 0.0
      %1687 = vmatpush1.msra.mxu0 0.0
      %1688 = vmatprep.subr.mxu0 0.0
      %1689 = vmatpush1.msra.mxu0 0.0
      %1690 = vmatprep.subr.mxu0 0.0
      %1691 = vmatpush1.msra.mxu0 0.0
      %1692 = vmatprep.subr.mxu0 0.0
      %1693 = vmatpush1.msra.mxu0 0.0
      %1694 = vmatprep.subr.mxu0 0.0
      %1695 = vmatpush1.msra.mxu0 0.0
      %1696 = vmatprep.subr.mxu0 0.0
      %1697 = vmatpush1.msra.mxu0 0.0
      %1698 = vmatprep.subr.mxu0 0.0
      %1699 = vmatpush1.msra.mxu0 0.0
      %1700 = vmatprep.subr.mxu0 0.0
      %1701 = vmatpush1.msra.mxu0 0.0
      %1702 = vmatprep.subr.mxu0 0.0
      %1703 = vmatpush1.msra.mxu0 0.0
      %1704 = vmatprep.subr.mxu0 0.0
      %1705 = vmatpush1.msra.mxu0 0.0
      %1706 = vmatprep.subr.mxu0 0.0
      %1707 = vmatpush1.msra.mxu0 0.0
      %1708 = vmatprep.subr.mxu0 0.0
      %1709 = vmatpush1.msra.mxu0 0.0
      %1710 = vmatprep.subr.mxu0 0.0
      %1711 = vmatpush1.msra.mxu0 0.0
      %1712 = vmatprep.subr.mxu0 0.0
      %1713 = vmatpush1.msra.mxu0 0.0
      %1714 = vmatprep.subr.mxu0 0.0
      %1715 = vmatpush1.msra.mxu0 0.0
      %1716 = vmatprep.subr.mxu0 0.0
      %1717 = vmatpush1.msra.mxu0 0.0
      %1718 = vmatprep.subr.mxu0 0.0
      %1719 = vmatpush1.msra.mxu0 0.0
      %1720 = vmatprep.subr.mxu0 0.0
      %1721 = vmatpush1.msra.mxu0 0.0
      %1722 = vmatprep.mubr.f32.mxu0 0.0
      %1723 = vmatmul.mubr.f32.gmra.mrb[0].mxu0 %v1647
      %v1724 = vpop.f32.mrb[0].mxu0
      %v1725 = vadd.f32 0.0, %v1724
      %v1726 = vpop.f32.mrb[0].mxu0
      %v1727 = vadd.f32 0.0, %v1726
      %1728 = vmatprep.mubr.f32.mxu0 0.0
      %1729 = vmatmul.mubr.f32.gmra.mrb[0].mxu0 %v1650
      %v1730 = vpop.f32.mrb[0].mxu0
      %v1731 = vadd.f32 0.0, %v1730
      %v1732 = vpop.f32.mrb[0].mxu0
      %v1733 = vadd.f32 0.0, %v1732
      %1734 = vmatprep.mubr.f32.mxu0 0.0
      %1735 = vmatmul.mubr.f32.gmra.mrb[0].mxu0 %v1653
      %v1736 = vpop.f32.mrb[0].mxu0
      %v1737 = vadd.f32 0.0, %v1736
      %v1738 = vpop.f32.mrb[0].mxu0
      %v1739 = vadd.f32 0.0, %v1738
      %1740 = vmatprep.mubr.f32.mxu0 0.0
      %1741 = vmatmul.mubr.f32.gmra.mrb[0].mxu0 %v1656
      %v1742 = vpop.f32.mrb[0].mxu0
      %v1743 = vadd.f32 0.0, %v1742
      %v1744 = vpop.f32.mrb[0].mxu0
      %v1745 = vadd.f32 0.0, %v1744
      %1746 = vdwg.mxu0
      %v1747 = vadd.f32 %v1612, %v1725
      %v1748 = vadd.f32 %v1614, %v1727
      %v1749 = vadd.f32 %v1618, %v1731
      %v1750 = vadd.f32 %v1620, %v1733
      %v1751 = vadd.f32 %v1624, %v1737
      %v1752 = vadd.f32 %v1626, %v1739
      %v1753 = vadd.f32 %v1630, %v1743
      %v1754 = vadd.f32 %v1632, %v1745
      %1755 = vrot.lane.b32.xlu0 %v1380, 112
      %v1756 = vpop.permute.xlu0 %1755
      %1757 = vrot.lane.b32.xlu0 %v1382, 112
      %v1758 = vpop.permute.xlu0 %1757
      %1759 = vrot.lane.b32.xlu0 %v1381, 112
      %v1760 = vpop.permute.xlu0 %1759
      %1761 = vrot.lane.b32.xlu0 %v1383, 112
      %v1762 = vpop.permute.xlu0 %1761
      %v1763 = vsel %vm756, %v1756, %v1760
      %v1764 = vsel %vm756, %v1758, %v1762
      %v1765 = vsel %vm756, %v1760, %v1756
      %v1766 = vsel %vm756, %v1762, %v1758
      %v1768 = vsel %vm481, %v1396, 0
      %v1771 = vsel %vm481, %v1397, 0
      %v1774 = vsel %vm481, %v1398, 0
      %v1777 = vsel %vm481, %v1399, 0
      %1779 = vmatprep.subr.mxu0 %v1765
      %1780 = vmatpush1.msra.mxu0 %v1763
      %1781 = vmatprep.subr.mxu0 %v1766
      %1782 = vmatpush1.msra.mxu0 %v1764
      %1783 = vmatprep.subr.mxu0 0.0
      %1784 = vmatpush1.msra.mxu0 0.0
      %1785 = vmatprep.subr.mxu0 0.0
      %1786 = vmatpush1.msra.mxu0 0.0
      %1787 = vmatprep.subr.mxu0 0.0
      %1788 = vmatpush1.msra.mxu0 0.0
      %1789 = vmatprep.subr.mxu0 0.0
      %1790 = vmatpush1.msra.mxu0 0.0
      %1791 = vmatprep.subr.mxu0 0.0
      %1792 = vmatpush1.msra.mxu0 0.0
      %1793 = vmatprep.subr.mxu0 0.0
      %1794 = vmatpush1.msra.mxu0 0.0
      %1795 = vmatprep.subr.mxu0 0.0
      %1796 = vmatpush1.msra.mxu0 0.0
      %1797 = vmatprep.subr.mxu0 0.0
      %1798 = vmatpush1.msra.mxu0 0.0
      %1799 = vmatprep.subr.mxu0 0.0
      %1800 = vmatpush1.msra.mxu0 0.0
      %1801 = vmatprep.subr.mxu0 0.0
      %1802 = vmatpush1.msra.mxu0 0.0
      %1803 = vmatprep.subr.mxu0 0.0
      %1804 = vmatpush1.msra.mxu0 0.0
      %1805 = vmatprep.subr.mxu0 0.0
      %1806 = vmatpush1.msra.mxu0 0.0
      %1807 = vmatprep.subr.mxu0 0.0
      %1808 = vmatpush1.msra.mxu0 0.0
      %1809 = vmatprep.subr.mxu0 0.0
      %1810 = vmatpush1.msra.mxu0 0.0
      %1811 = vmatprep.subr.mxu0 0.0
      %1812 = vmatpush1.msra.mxu0 0.0
      %1813 = vmatprep.subr.mxu0 0.0
      %1814 = vmatpush1.msra.mxu0 0.0
      %1815 = vmatprep.subr.mxu0 0.0
      %1816 = vmatpush1.msra.mxu0 0.0
      %1817 = vmatprep.subr.mxu0 0.0
      %1818 = vmatpush1.msra.mxu0 0.0
      %1819 = vmatprep.subr.mxu0 0.0
      %1820 = vmatpush1.msra.mxu0 0.0
      %1821 = vmatprep.subr.mxu0 0.0
      %1822 = vmatpush1.msra.mxu0 0.0
      %1823 = vmatprep.subr.mxu0 0.0
      %1824 = vmatpush1.msra.mxu0 0.0
      %1825 = vmatprep.subr.mxu0 0.0
      %1826 = vmatpush1.msra.mxu0 0.0
      %1827 = vmatprep.subr.mxu0 0.0
      %1828 = vmatpush1.msra.mxu0 0.0
      %1829 = vmatprep.subr.mxu0 0.0
      %1830 = vmatpush1.msra.mxu0 0.0
      %1831 = vmatprep.subr.mxu0 0.0
      %1832 = vmatpush1.msra.mxu0 0.0
      %1833 = vmatprep.subr.mxu0 0.0
      %1834 = vmatpush1.msra.mxu0 0.0
      %1835 = vmatprep.subr.mxu0 0.0
      %1836 = vmatpush1.msra.mxu0 0.0
      %1837 = vmatprep.subr.mxu0 0.0
      %1838 = vmatpush1.msra.mxu0 0.0
      %1839 = vmatprep.subr.mxu0 0.0
      %1840 = vmatpush1.msra.mxu0 0.0
      %1841 = vmatprep.subr.mxu0 0.0
      %1842 = vmatpush1.msra.mxu0 0.0
      %1843 = vmatprep.mubr.f32.mxu0 0.0
      %1844 = vmatmul.mubr.f32.gmra.mrb[0].mxu0 %v1768
      %v1845 = vpop.f32.mrb[0].mxu0
      %v1846 = vadd.f32 0.0, %v1845
      %v1847 = vpop.f32.mrb[0].mxu0
      %v1848 = vadd.f32 0.0, %v1847
      %1849 = vmatprep.mubr.f32.mxu0 0.0
      %1850 = vmatmul.mubr.f32.gmra.mrb[0].mxu0 %v1771
      %v1851 = vpop.f32.mrb[0].mxu0
      %v1852 = vadd.f32 0.0, %v1851
      %v1853 = vpop.f32.mrb[0].mxu0
      %v1854 = vadd.f32 0.0, %v1853
      %1855 = vmatprep.mubr.f32.mxu0 0.0
      %1856 = vmatmul.mubr.f32.gmra.mrb[0].mxu0 %v1774
      %v1857 = vpop.f32.mrb[0].mxu0
      %v1858 = vadd.f32 0.0, %v1857
      %v1859 = vpop.f32.mrb[0].mxu0
      %v1860 = vadd.f32 0.0, %v1859
      %1861 = vmatprep.mubr.f32.mxu0 0.0
      %1862 = vmatmul.mubr.f32.gmra.mrb[0].mxu0 %v1777
      %v1863 = vpop.f32.mrb[0].mxu0
      %v1864 = vadd.f32 0.0, %v1863
      %v1865 = vpop.f32.mrb[0].mxu0
      %v1866 = vadd.f32 0.0, %v1865
      %1867 = vdwg.mxu0
      %v1868 = vadd.f32 %v1747, %v1846
      %v1869 = vadd.f32 %v1748, %v1848
      %v1870 = vadd.f32 %v1749, %v1852
      %v1871 = vadd.f32 %v1750, %v1854
      %v1872 = vadd.f32 %v1751, %v1858
      %v1873 = vadd.f32 %v1752, %v1860
      %v1874 = vadd.f32 %v1753, %v1864
      %v1875 = vadd.f32 %v1754, %v1866
      %1876 = vrot.lane.b32.xlu0 %v1380, 111
      %v1877 = vpop.permute.xlu0 %1876
      %1878 = vrot.lane.b32.xlu0 %v1382, 111
      %v1879 = vpop.permute.xlu0 %1878
      %1880 = vrot.lane.b32.xlu0 %v1381, 111
      %v1881 = vpop.permute.xlu0 %1880
      %1882 = vrot.lane.b32.xlu0 %v1383, 111
      %v1883 = vpop.permute.xlu0 %1882
      %v1884 = vsel %vm856, %v1877, %v1881
      %v1885 = vsel %vm856, %v1879, %v1883
      %v1886 = vsel %vm856, %v1881, %v1877
      %v1887 = vsel %vm856, %v1883, %v1879
      %v1889 = vsel %vm481, %v1400, 0
      %v1892 = vsel %vm481, %v1401, 0
      %v1895 = vsel %vm481, %v1402, 0
      %v1898 = vsel %vm481, %v1403, 0
      %1900 = vmatprep.subr.mxu0 %v1886
      %1901 = vmatpush1.msra.mxu0 %v1884
      %1902 = vmatprep.subr.mxu0 %v1887
      %1903 = vmatpush1.msra.mxu0 %v1885
      %1904 = vmatprep.subr.mxu0 0.0
      %1905 = vmatpush1.msra.mxu0 0.0
      %1906 = vmatprep.subr.mxu0 0.0
      %1907 = vmatpush1.msra.mxu0 0.0
      %1908 = vmatprep.subr.mxu0 0.0
      %1909 = vmatpush1.msra.mxu0 0.0
      %1910 = vmatprep.subr.mxu0 0.0
      %1911 = vmatpush1.msra.mxu0 0.0
      %1912 = vmatprep.subr.mxu0 0.0
      %1913 = vmatpush1.msra.mxu0 0.0
      %1914 = vmatprep.subr.mxu0 0.0
      %1915 = vmatpush1.msra.mxu0 0.0
      %1916 = vmatprep.subr.mxu0 0.0
      %1917 = vmatpush1.msra.mxu0 0.0
      %1918 = vmatprep.subr.mxu0 0.0
      %1919 = vmatpush1.msra.mxu0 0.0
      %1920 = vmatprep.subr.mxu0 0.0
      %1921 = vmatpush1.msra.mxu0 0.0
      %1922 = vmatprep.subr.mxu0 0.0
      %1923 = vmatpush1.msra.mxu0 0.0
      %1924 = vmatprep.subr.mxu0 0.0
      %1925 = vmatpush1.msra.mxu0 0.0
      %1926 = vmatprep.subr.mxu0 0.0
      %1927 = vmatpush1.msra.mxu0 0.0
      %1928 = vmatprep.subr.mxu0 0.0
      %1929 = vmatpush1.msra.mxu0 0.0
      %1930 = vmatprep.subr.mxu0 0.0
      %1931 = vmatpush1.msra.mxu0 0.0
      %1932 = vmatprep.subr.mxu0 0.0
      %1933 = vmatpush1.msra.mxu0 0.0
      %1934 = vmatprep.subr.mxu0 0.0
      %1935 = vmatpush1.msra.mxu0 0.0
      %1936 = vmatprep.subr.mxu0 0.0
      %1937 = vmatpush1.msra.mxu0 0.0
      %1938 = vmatprep.subr.mxu0 0.0
      %1939 = vmatpush1.msra.mxu0 0.0
      %1940 = vmatprep.subr.mxu0 0.0
      %1941 = vmatpush1.msra.mxu0 0.0
      %1942 = vmatprep.subr.mxu0 0.0
      %1943 = vmatpush1.msra.mxu0 0.0
      %1944 = vmatprep.subr.mxu0 0.0
      %1945 = vmatpush1.msra.mxu0 0.0
      %1946 = vmatprep.subr.mxu0 0.0
      %1947 = vmatpush1.msra.mxu0 0.0
      %1948 = vmatprep.subr.mxu0 0.0
      %1949 = vmatpush1.msra.mxu0 0.0
      %1950 = vmatprep.subr.mxu0 0.0
      %1951 = vmatpush1.msra.mxu0 0.0
      %1952 = vmatprep.subr.mxu0 0.0
      %1953 = vmatpush1.msra.mxu0 0.0
      %1954 = vmatprep.subr.mxu0 0.0
      %1955 = vmatpush1.msra.mxu0 0.0
      %1956 = vmatprep.subr.mxu0 0.0
      %1957 = vmatpush1.msra.mxu0 0.0
      %1958 = vmatprep.subr.mxu0 0.0
      %1959 = vmatpush1.msra.mxu0 0.0
      %1960 = vmatprep.subr.mxu0 0.0
      %1961 = vmatpush1.msra.mxu0 0.0
      %1962 = vmatprep.subr.mxu0 0.0
      %1963 = vmatpush1.msra.mxu0 0.0
      %1964 = vmatprep.mubr.f32.mxu0 0.0
      %1965 = vmatmul.mubr.f32.gmra.mrb[0].mxu0 %v1889
      %v1966 = vpop.f32.mrb[0].mxu0
      %v1967 = vadd.f32 0.0, %v1966
      %v1968 = vpop.f32.mrb[0].mxu0
      %v1969 = vadd.f32 0.0, %v1968
      %1970 = vmatprep.mubr.f32.mxu0 0.0
      %1971 = vmatmul.mubr.f32.gmra.mrb[0].mxu0 %v1892
      %v1972 = vpop.f32.mrb[0].mxu0
      %v1973 = vadd.f32 0.0, %v1972
      %v1974 = vpop.f32.mrb[0].mxu0
      %v1975 = vadd.f32 0.0, %v1974
      %1976 = vmatprep.mubr.f32.mxu0 0.0
      %1977 = vmatmul.mubr.f32.gmra.mrb[0].mxu0 %v1895
      %v1978 = vpop.f32.mrb[0].mxu0
      %v1979 = vadd.f32 0.0, %v1978
      %v1980 = vpop.f32.mrb[0].mxu0
      %v1981 = vadd.f32 0.0, %v1980
      %1982 = vmatprep.mubr.f32.mxu0 0.0
      %1983 = vmatmul.mubr.f32.gmra.mrb[0].mxu0 %v1898
      %v1984 = vpop.f32.mrb[0].mxu0
      %v1985 = vadd.f32 0.0, %v1984
      %v1986 = vpop.f32.mrb[0].mxu0
      %v1987 = vadd.f32 0.0, %v1986
      %1988 = vdwg.mxu0
      %v1989 = vadd.f32 %v1868, %v1967
      %v1990 = vadd.f32 %v1869, %v1969
      %v1991 = vadd.f32 %v1870, %v1973
      %v1992 = vadd.f32 %v1871, %v1975
      %v1993 = vadd.f32 %v1872, %v1979
      %v1994 = vadd.f32 %v1873, %v1981
      %v1995 = vadd.f32 %v1874, %v1985
      %v1996 = vadd.f32 %v1875, %v1987
      %1997 = vrot.lane.b32.xlu0 %v1380, 110
      %v1998 = vpop.permute.xlu0 %1997
      %1999 = vrot.lane.b32.xlu0 %v1382, 110
      %v2000 = vpop.permute.xlu0 %1999
      %2001 = vrot.lane.b32.xlu0 %v1381, 110
      %v2002 = vpop.permute.xlu0 %2001
      %2003 = vrot.lane.b32.xlu0 %v1383, 110
      %v2004 = vpop.permute.xlu0 %2003
      %v2005 = vsel %vm956, %v1998, %v2002
      %v2006 = vsel %vm956, %v2000, %v2004
      %v2007 = vsel %vm956, %v2002, %v1998
      %v2008 = vsel %vm956, %v2004, %v2000
      %v2010 = vsel %vm481, %v1404, 0
      %v2013 = vsel %vm481, %v1405, 0
      %v2016 = vsel %vm481, %v1406, 0
      %v2019 = vsel %vm481, %v1407, 0
      %2021 = vmatprep.subr.mxu0 %v2007
      %2022 = vmatpush1.msra.mxu0 %v2005
      %2023 = vmatprep.subr.mxu0 %v2008
      %2024 = vmatpush1.msra.mxu0 %v2006
      %2025 = vmatprep.subr.mxu0 0.0
      %2026 = vmatpush1.msra.mxu0 0.0
      %2027 = vmatprep.subr.mxu0 0.0
      %2028 = vmatpush1.msra.mxu0 0.0
      %2029 = vmatprep.subr.mxu0 0.0
      %2030 = vmatpush1.msra.mxu0 0.0
      %2031 = vmatprep.subr.mxu0 0.0
      %2032 = vmatpush1.msra.mxu0 0.0
      %2033 = vmatprep.subr.mxu0 0.0
      %2034 = vmatpush1.msra.mxu0 0.0
      %2035 = vmatprep.subr.mxu0 0.0
      %2036 = vmatpush1.msra.mxu0 0.0
      %2037 = vmatprep.subr.mxu0 0.0
      %2038 = vmatpush1.msra.mxu0 0.0
      %2039 = vmatprep.subr.mxu0 0.0
      %2040 = vmatpush1.msra.mxu0 0.0
      %2041 = vmatprep.subr.mxu0 0.0
      %2042 = vmatpush1.msra.mxu0 0.0
      %2043 = vmatprep.subr.mxu0 0.0
      %2044 = vmatpush1.msra.mxu0 0.0
      %2045 = vmatprep.subr.mxu0 0.0
      %2046 = vmatpush1.msra.mxu0 0.0
      %2047 = vmatprep.subr.mxu0 0.0
      %2048 = vmatpush1.msra.mxu0 0.0
      %2049 = vmatprep.subr.mxu0 0.0
      %2050 = vmatpush1.msra.mxu0 0.0
      %2051 = vmatprep.subr.mxu0 0.0
      %2052 = vmatpush1.msra.mxu0 0.0
      %2053 = vmatprep.subr.mxu0 0.0
      %2054 = vmatpush1.msra.mxu0 0.0
      %2055 = vmatprep.subr.mxu0 0.0
      %2056 = vmatpush1.msra.mxu0 0.0
      %2057 = vmatprep.subr.mxu0 0.0
      %2058 = vmatpush1.msra.mxu0 0.0
      %2059 = vmatprep.subr.mxu0 0.0
      %2060 = vmatpush1.msra.mxu0 0.0
      %2061 = vmatprep.subr.mxu0 0.0
      %2062 = vmatpush1.msra.mxu0 0.0
      %2063 = vmatprep.subr.mxu0 0.0
      %2064 = vmatpush1.msra.mxu0 0.0
      %2065 = vmatprep.subr.mxu0 0.0
      %2066 = vmatpush1.msra.mxu0 0.0
      %2067 = vmatprep.subr.mxu0 0.0
      %2068 = vmatpush1.msra.mxu0 0.0
      %2069 = vmatprep.subr.mxu0 0.0
      %2070 = vmatpush1.msra.mxu0 0.0
      %2071 = vmatprep.subr.mxu0 0.0
      %2072 = vmatpush1.msra.mxu0 0.0
      %2073 = vmatprep.subr.mxu0 0.0
      %2074 = vmatpush1.msra.mxu0 0.0
      %2075 = vmatprep.subr.mxu0 0.0
      %2076 = vmatpush1.msra.mxu0 0.0
      %2077 = vmatprep.subr.mxu0 0.0
      %2078 = vmatpush1.msra.mxu0 0.0
      %2079 = vmatprep.subr.mxu0 0.0
      %2080 = vmatpush1.msra.mxu0 0.0
      %2081 = vmatprep.subr.mxu0 0.0
      %2082 = vmatpush1.msra.mxu0 0.0
      %2083 = vmatprep.subr.mxu0 0.0
      %2084 = vmatpush1.msra.mxu0 0.0
      %2085 = vmatprep.mubr.f32.mxu0 0.0
      %2086 = vmatmul.mubr.f32.gmra.mrb[0].mxu0 %v2010
      %v2087 = vpop.f32.mrb[0].mxu0
      %v2088 = vadd.f32 0.0, %v2087
      %v2089 = vpop.f32.mrb[0].mxu0
      %v2090 = vadd.f32 0.0, %v2089
      %2091 = vmatprep.mubr.f32.mxu0 0.0
      %2092 = vmatmul.mubr.f32.gmra.mrb[0].mxu0 %v2013
      %v2093 = vpop.f32.mrb[0].mxu0
      %v2094 = vadd.f32 0.0, %v2093
      %v2095 = vpop.f32.mrb[0].mxu0
      %v2096 = vadd.f32 0.0, %v2095
      %2097 = vmatprep.mubr.f32.mxu0 0.0
      %2098 = vmatmul.mubr.f32.gmra.mrb[0].mxu0 %v2016
      %v2099 = vpop.f32.mrb[0].mxu0
      %v2100 = vadd.f32 0.0, %v2099
      %v2101 = vpop.f32.mrb[0].mxu0
      %v2102 = vadd.f32 0.0, %v2101
      %2103 = vmatprep.mubr.f32.mxu0 0.0
      %2104 = vmatmul.mubr.f32.gmra.mrb[0].mxu0 %v2019
      %v2105 = vpop.f32.mrb[0].mxu0
      %v2106 = vadd.f32 0.0, %v2105
      %v2107 = vpop.f32.mrb[0].mxu0
      %v2108 = vadd.f32 0.0, %v2107
      %2109 = vdwg.mxu0
      %v2110 = vadd.f32 %v1989, %v2088
      %v2111 = vadd.f32 %v1990, %v2090
      %v2112 = vadd.f32 %v1991, %v2094
      %v2113 = vadd.f32 %v1992, %v2096
      %v2114 = vadd.f32 %v1993, %v2100
      %v2115 = vadd.f32 %v1994, %v2102
      %v2116 = vadd.f32 %v1995, %v2106
      %v2117 = vadd.f32 %v1996, %v2108
      %2118 = vrot.lane.b32.xlu0 %v1380, 96
      %v2119 = vpop.permute.xlu0 %2118
      %2120 = vrot.lane.b32.xlu0 %v1382, 96
      %v2121 = vpop.permute.xlu0 %2120
      %2122 = vrot.lane.b32.xlu0 %v1381, 96
      %v2123 = vpop.permute.xlu0 %2122
      %2124 = vrot.lane.b32.xlu0 %v1383, 96
      %v2125 = vpop.permute.xlu0 %2124
      %v2126 = vsel %vm1056, %v2119, %v2123
      %v2127 = vsel %vm1056, %v2121, %v2125
      %v2128 = vsel %vm1056, %v2123, %v2119
      %v2129 = vsel %vm1056, %v2125, %v2121
      %v2131 = vsel %vm481, %v1408, 0
      %v2134 = vsel %vm481, %v1409, 0
      %v2137 = vsel %vm481, %v1410, 0
      %v2140 = vsel %vm481, %v1411, 0
      %2142 = vmatprep.subr.mxu0 %v2128
      %2143 = vmatpush1.msra.mxu0 %v2126
      %2144 = vmatprep.subr.mxu0 %v2129
      %2145 = vmatpush1.msra.mxu0 %v2127
      %2146 = vmatprep.subr.mxu0 0.0
      %2147 = vmatpush1.msra.mxu0 0.0
      %2148 = vmatprep.subr.mxu0 0.0
      %2149 = vmatpush1.msra.mxu0 0.0
      %2150 = vmatprep.subr.mxu0 0.0
      %2151 = vmatpush1.msra.mxu0 0.0
      %2152 = vmatprep.subr.mxu0 0.0
      %2153 = vmatpush1.msra.mxu0 0.0
      %2154 = vmatprep.subr.mxu0 0.0
      %2155 = vmatpush1.msra.mxu0 0.0
      %2156 = vmatprep.subr.mxu0 0.0
      %2157 = vmatpush1.msra.mxu0 0.0
      %2158 = vmatprep.subr.mxu0 0.0
      %2159 = vmatpush1.msra.mxu0 0.0
      %2160 = vmatprep.subr.mxu0 0.0
      %2161 = vmatpush1.msra.mxu0 0.0
      %2162 = vmatprep.subr.mxu0 0.0
      %2163 = vmatpush1.msra.mxu0 0.0
      %2164 = vmatprep.subr.mxu0 0.0
      %2165 = vmatpush1.msra.mxu0 0.0
      %2166 = vmatprep.subr.mxu0 0.0
      %2167 = vmatpush1.msra.mxu0 0.0
      %2168 = vmatprep.subr.mxu0 0.0
      %2169 = vmatpush1.msra.mxu0 0.0
      %2170 = vmatprep.subr.mxu0 0.0
      %2171 = vmatpush1.msra.mxu0 0.0
      %2172 = vmatprep.subr.mxu0 0.0
      %2173 = vmatpush1.msra.mxu0 0.0
      %2174 = vmatprep.subr.mxu0 0.0
      %2175 = vmatpush1.msra.mxu0 0.0
      %2176 = vmatprep.subr.mxu0 0.0
      %2177 = vmatpush1.msra.mxu0 0.0
      %2178 = vmatprep.subr.mxu0 0.0
      %2179 = vmatpush1.msra.mxu0 0.0
      %2180 = vmatprep.subr.mxu0 0.0
      %2181 = vmatpush1.msra.mxu0 0.0
      %2182 = vmatprep.subr.mxu0 0.0
      %2183 = vmatpush1.msra.mxu0 0.0
      %2184 = vmatprep.subr.mxu0 0.0
      %2185 = vmatpush1.msra.mxu0 0.0
      %2186 = vmatprep.subr.mxu0 0.0
      %2187 = vmatpush1.msra.mxu0 0.0
      %2188 = vmatprep.subr.mxu0 0.0
      %2189 = vmatpush1.msra.mxu0 0.0
      %2190 = vmatprep.subr.mxu0 0.0
      %2191 = vmatpush1.msra.mxu0 0.0
      %2192 = vmatprep.subr.mxu0 0.0
      %2193 = vmatpush1.msra.mxu0 0.0
      %2194 = vmatprep.subr.mxu0 0.0
      %2195 = vmatpush1.msra.mxu0 0.0
      %2196 = vmatprep.subr.mxu0 0.0
      %2197 = vmatpush1.msra.mxu0 0.0
      %2198 = vmatprep.subr.mxu0 0.0
      %2199 = vmatpush1.msra.mxu0 0.0
      %2200 = vmatprep.subr.mxu0 0.0
      %2201 = vmatpush1.msra.mxu0 0.0
      %2202 = vmatprep.subr.mxu0 0.0
      %2203 = vmatpush1.msra.mxu0 0.0
      %2204 = vmatprep.subr.mxu0 0.0
      %2205 = vmatpush1.msra.mxu0 0.0
      %2206 = vmatprep.mubr.f32.mxu0 0.0
      %2207 = vmatmul.mubr.f32.gmra.mrb[0].mxu0 %v2131
      %v2208 = vpop.f32.mrb[0].mxu0
      %v2209 = vadd.f32 0.0, %v2208
      %v2210 = vpop.f32.mrb[0].mxu0
      %v2211 = vadd.f32 0.0, %v2210
      %2212 = vmatprep.mubr.f32.mxu0 0.0
      %2213 = vmatmul.mubr.f32.gmra.mrb[0].mxu0 %v2134
      %v2214 = vpop.f32.mrb[0].mxu0
      %v2215 = vadd.f32 0.0, %v2214
      %v2216 = vpop.f32.mrb[0].mxu0
      %v2217 = vadd.f32 0.0, %v2216
      %2218 = vmatprep.mubr.f32.mxu0 0.0
      %2219 = vmatmul.mubr.f32.gmra.mrb[0].mxu0 %v2137
      %v2220 = vpop.f32.mrb[0].mxu0
      %v2221 = vadd.f32 0.0, %v2220
      %v2222 = vpop.f32.mrb[0].mxu0
      %v2223 = vadd.f32 0.0, %v2222
      %2224 = vmatprep.mubr.f32.mxu0 0.0
      %2225 = vmatmul.mubr.f32.gmra.mrb[0].mxu0 %v2140
      %v2226 = vpop.f32.mrb[0].mxu0
      %v2227 = vadd.f32 0.0, %v2226
      %v2228 = vpop.f32.mrb[0].mxu0
      %v2229 = vadd.f32 0.0, %v2228
      %2230 = vdwg.mxu0
      %v2231 = vadd.f32 %v2110, %v2209
      %v2232 = vadd.f32 %v2111, %v2211
      %v2233 = vadd.f32 %v2112, %v2215
      %v2234 = vadd.f32 %v2113, %v2217
      %v2235 = vadd.f32 %v2114, %v2221
      %v2236 = vadd.f32 %v2115, %v2223
      %v2237 = vadd.f32 %v2116, %v2227
      %v2238 = vadd.f32 %v2117, %v2229
      %2239 = vrot.lane.b32.xlu0 %v1380, 95
      %v2240 = vpop.permute.xlu0 %2239
      %2241 = vrot.lane.b32.xlu0 %v1382, 95
      %v2242 = vpop.permute.xlu0 %2241
      %2243 = vrot.lane.b32.xlu0 %v1381, 95
      %v2244 = vpop.permute.xlu0 %2243
      %2245 = vrot.lane.b32.xlu0 %v1383, 95
      %v2246 = vpop.permute.xlu0 %2245
      %v2247 = vsel %vm1156, %v2240, %v2244
      %v2248 = vsel %vm1156, %v2242, %v2246
      %v2249 = vsel %vm1156, %v2244, %v2240
      %v2250 = vsel %vm1156, %v2246, %v2242
      %v2252 = vsel %vm481, %v1412, 0
      %v2255 = vsel %vm481, %v1413, 0
      %v2258 = vsel %vm481, %v1414, 0
      %v2261 = vsel %vm481, %v1415, 0
      %2263 = vmatprep.subr.mxu0 %v2249
      %2264 = vmatpush1.msra.mxu0 %v2247
      %2265 = vmatprep.subr.mxu0 %v2250
      %2266 = vmatpush1.msra.mxu0 %v2248
      %2267 = vmatprep.subr.mxu0 0.0
      %2268 = vmatpush1.msra.mxu0 0.0
      %2269 = vmatprep.subr.mxu0 0.0
      %2270 = vmatpush1.msra.mxu0 0.0
      %2271 = vmatprep.subr.mxu0 0.0
      %2272 = vmatpush1.msra.mxu0 0.0
      %2273 = vmatprep.subr.mxu0 0.0
      %2274 = vmatpush1.msra.mxu0 0.0
      %2275 = vmatprep.subr.mxu0 0.0
      %2276 = vmatpush1.msra.mxu0 0.0
      %2277 = vmatprep.subr.mxu0 0.0
      %2278 = vmatpush1.msra.mxu0 0.0
      %2279 = vmatprep.subr.mxu0 0.0
      %2280 = vmatpush1.msra.mxu0 0.0
      %2281 = vmatprep.subr.mxu0 0.0
      %2282 = vmatpush1.msra.mxu0 0.0
      %2283 = vmatprep.subr.mxu0 0.0
      %2284 = vmatpush1.msra.mxu0 0.0
      %2285 = vmatprep.subr.mxu0 0.0
      %2286 = vmatpush1.msra.mxu0 0.0
      %2287 = vmatprep.subr.mxu0 0.0
      %2288 = vmatpush1.msra.mxu0 0.0
      %2289 = vmatprep.subr.mxu0 0.0
      %2290 = vmatpush1.msra.mxu0 0.0
      %2291 = vmatprep.subr.mxu0 0.0
      %2292 = vmatpush1.msra.mxu0 0.0
      %2293 = vmatprep.subr.mxu0 0.0
      %2294 = vmatpush1.msra.mxu0 0.0
      %2295 = vmatprep.subr.mxu0 0.0
      %2296 = vmatpush1.msra.mxu0 0.0
      %2297 = vmatprep.subr.mxu0 0.0
      %2298 = vmatpush1.msra.mxu0 0.0
      %2299 = vmatprep.subr.mxu0 0.0
      %2300 = vmatpush1.msra.mxu0 0.0
      %2301 = vmatprep.subr.mxu0 0.0
      %2302 = vmatpush1.msra.mxu0 0.0
      %2303 = vmatprep.subr.mxu0 0.0
      %2304 = vmatpush1.msra.mxu0 0.0
      %2305 = vmatprep.subr.mxu0 0.0
      %2306 = vmatpush1.msra.mxu0 0.0
      %2307 = vmatprep.subr.mxu0 0.0
      %2308 = vmatpush1.msra.mxu0 0.0
      %2309 = vmatprep.subr.mxu0 0.0
      %2310 = vmatpush1.msra.mxu0 0.0
      %2311 = vmatprep.subr.mxu0 0.0
      %2312 = vmatpush1.msra.mxu0 0.0
      %2313 = vmatprep.subr.mxu0 0.0
      %2314 = vmatpush1.msra.mxu0 0.0
      %2315 = vmatprep.subr.mxu0 0.0
      %2316 = vmatpush1.msra.mxu0 0.0
      %2317 = vmatprep.subr.mxu0 0.0
      %2318 = vmatpush1.msra.mxu0 0.0
      %2319 = vmatprep.subr.mxu0 0.0
      %2320 = vmatpush1.msra.mxu0 0.0
      %2321 = vmatprep.subr.mxu0 0.0
      %2322 = vmatpush1.msra.mxu0 0.0
      %2323 = vmatprep.subr.mxu0 0.0
      %2324 = vmatpush1.msra.mxu0 0.0
      %2325 = vmatprep.subr.mxu0 0.0
      %2326 = vmatpush1.msra.mxu0 0.0
      %2327 = vmatprep.mubr.f32.mxu0 0.0
      %2328 = vmatmul.mubr.f32.gmra.mrb[0].mxu0 %v2252
      %v2329 = vpop.f32.mrb[0].mxu0
      %v2330 = vadd.f32 0.0, %v2329
      %v2331 = vpop.f32.mrb[0].mxu0
      %v2332 = vadd.f32 0.0, %v2331
      %2333 = vmatprep.mubr.f32.mxu0 0.0
      %2334 = vmatmul.mubr.f32.gmra.mrb[0].mxu0 %v2255
      %v2335 = vpop.f32.mrb[0].mxu0
      %v2336 = vadd.f32 0.0, %v2335
      %v2337 = vpop.f32.mrb[0].mxu0
      %v2338 = vadd.f32 0.0, %v2337
      %2339 = vmatprep.mubr.f32.mxu0 0.0
      %2340 = vmatmul.mubr.f32.gmra.mrb[0].mxu0 %v2258
      %v2341 = vpop.f32.mrb[0].mxu0
      %v2342 = vadd.f32 0.0, %v2341
      %v2343 = vpop.f32.mrb[0].mxu0
      %v2344 = vadd.f32 0.0, %v2343
      %2345 = vmatprep.mubr.f32.mxu0 0.0
      %2346 = vmatmul.mubr.f32.gmra.mrb[0].mxu0 %v2261
      %v2347 = vpop.f32.mrb[0].mxu0
      %v2348 = vadd.f32 0.0, %v2347
      %v2349 = vpop.f32.mrb[0].mxu0
      %v2350 = vadd.f32 0.0, %v2349
      %2351 = vdwg.mxu0
      %v2352 = vadd.f32 %v2231, %v2330
      %v2353 = vadd.f32 %v2232, %v2332
      %v2354 = vadd.f32 %v2233, %v2336
      %v2355 = vadd.f32 %v2234, %v2338
      %v2356 = vadd.f32 %v2235, %v2342
      %v2357 = vadd.f32 %v2236, %v2344
      %v2358 = vadd.f32 %v2237, %v2348
      %v2359 = vadd.f32 %v2238, %v2350
      %2360 = vrot.lane.b32.xlu0 %v1380, 94
      %v2361 = vpop.permute.xlu0 %2360
      %2362 = vrot.lane.b32.xlu0 %v1382, 94
      %v2363 = vpop.permute.xlu0 %2362
      %2364 = vrot.lane.b32.xlu0 %v1381, 94
      %v2365 = vpop.permute.xlu0 %2364
      %2366 = vrot.lane.b32.xlu0 %v1383, 94
      %v2367 = vpop.permute.xlu0 %2366
      %v2368 = vsel %vm1256, %v2361, %v2365
      %v2369 = vsel %vm1256, %v2363, %v2367
      %v2370 = vsel %vm1256, %v2365, %v2361
      %v2371 = vsel %vm1256, %v2367, %v2363
      %v2373 = vsel %vm481, %v1416, 0
      %v2376 = vsel %vm481, %v1417, 0
      %v2379 = vsel %vm481, %v1418, 0
      %v2382 = vsel %vm481, %v1419, 0
      %2384 = vmatprep.subr.mxu0 %v2370
      %2385 = vmatpush1.msra.mxu0 %v2368
      %2386 = vmatprep.subr.mxu0 %v2371
      %2387 = vmatpush1.msra.mxu0 %v2369
      %2388 = vmatprep.subr.mxu0 0.0
      %2389 = vmatpush1.msra.mxu0 0.0
      %2390 = vmatprep.subr.mxu0 0.0
      %2391 = vmatpush1.msra.mxu0 0.0
      %2392 = vmatprep.subr.mxu0 0.0
      %2393 = vmatpush1.msra.mxu0 0.0
      %2394 = vmatprep.subr.mxu0 0.0
      %2395 = vmatpush1.msra.mxu0 0.0
      %2396 = vmatprep.subr.mxu0 0.0
      %2397 = vmatpush1.msra.mxu0 0.0
      %2398 = vmatprep.subr.mxu0 0.0
      %2399 = vmatpush1.msra.mxu0 0.0
      %2400 = vmatprep.subr.mxu0 0.0
      %2401 = vmatpush1.msra.mxu0 0.0
      %2402 = vmatprep.subr.mxu0 0.0
      %2403 = vmatpush1.msra.mxu0 0.0
      %2404 = vmatprep.subr.mxu0 0.0
      %2405 = vmatpush1.msra.mxu0 0.0
      %2406 = vmatprep.subr.mxu0 0.0
      %2407 = vmatpush1.msra.mxu0 0.0
      %2408 = vmatprep.subr.mxu0 0.0
      %2409 = vmatpush1.msra.mxu0 0.0
      %2410 = vmatprep.subr.mxu0 0.0
      %2411 = vmatpush1.msra.mxu0 0.0
      %2412 = vmatprep.subr.mxu0 0.0
      %2413 = vmatpush1.msra.mxu0 0.0
      %2414 = vmatprep.subr.mxu0 0.0
      %2415 = vmatpush1.msra.mxu0 0.0
      %2416 = vmatprep.subr.mxu0 0.0
      %2417 = vmatpush1.msra.mxu0 0.0
      %2418 = vmatprep.subr.mxu0 0.0
      %2419 = vmatpush1.msra.mxu0 0.0
      %2420 = vmatprep.subr.mxu0 0.0
      %2421 = vmatpush1.msra.mxu0 0.0
      %2422 = vmatprep.subr.mxu0 0.0
      %2423 = vmatpush1.msra.mxu0 0.0
      %2424 = vmatprep.subr.mxu0 0.0
      %2425 = vmatpush1.msra.mxu0 0.0
      %2426 = vmatprep.subr.mxu0 0.0
      %2427 = vmatpush1.msra.mxu0 0.0
      %2428 = vmatprep.subr.mxu0 0.0
      %2429 = vmatpush1.msra.mxu0 0.0
      %2430 = vmatprep.subr.mxu0 0.0
      %2431 = vmatpush1.msra.mxu0 0.0
      %2432 = vmatprep.subr.mxu0 0.0
      %2433 = vmatpush1.msra.mxu0 0.0
      %2434 = vmatprep.subr.mxu0 0.0
      %2435 = vmatpush1.msra.mxu0 0.0
      %2436 = vmatprep.subr.mxu0 0.0
      %2437 = vmatpush1.msra.mxu0 0.0
      %2438 = vmatprep.subr.mxu0 0.0
      %2439 = vmatpush1.msra.mxu0 0.0
      %2440 = vmatprep.subr.mxu0 0.0
      %2441 = vmatpush1.msra.mxu0 0.0
      %2442 = vmatprep.subr.mxu0 0.0
      %2443 = vmatpush1.msra.mxu0 0.0
      %2444 = vmatprep.subr.mxu0 0.0
      %2445 = vmatpush1.msra.mxu0 0.0
      %2446 = vmatprep.subr.mxu0 0.0
      %2447 = vmatpush1.msra.mxu0 0.0
      %2448 = vmatprep.mubr.f32.mxu0 0.0
      %2449 = vmatmul.mubr.f32.gmra.mrb[0].mxu0 %v2373
      %v2450 = vpop.f32.mrb[0].mxu0
      %v2451 = vadd.f32 0.0, %v2450
      %v2452 = vpop.f32.mrb[0].mxu0
      %v2453 = vadd.f32 0.0, %v2452
      %2454 = vmatprep.mubr.f32.mxu0 0.0
      %2455 = vmatmul.mubr.f32.gmra.mrb[0].mxu0 %v2376
      %v2456 = vpop.f32.mrb[0].mxu0
      %v2457 = vadd.f32 0.0, %v2456
      %v2458 = vpop.f32.mrb[0].mxu0
      %v2459 = vadd.f32 0.0, %v2458
      %2460 = vmatprep.mubr.f32.mxu0 0.0
      %2461 = vmatmul.mubr.f32.gmra.mrb[0].mxu0 %v2379
      %v2462 = vpop.f32.mrb[0].mxu0
      %v2463 = vadd.f32 0.0, %v2462
      %v2464 = vpop.f32.mrb[0].mxu0
      %v2465 = vadd.f32 0.0, %v2464
      %2466 = vmatprep.mubr.f32.mxu0 0.0
      %2467 = vmatmul.mubr.f32.gmra.mrb[0].mxu0 %v2382
      %v2468 = vpop.f32.mrb[0].mxu0
      %v2469 = vadd.f32 0.0, %v2468
      %v2470 = vpop.f32.mrb[0].mxu0
      %v2471 = vadd.f32 0.0, %v2470
      %2472 = vdwg.mxu0
      %v2473 = vadd.f32 %v2352, %v2451
      %v2474 = vadd.f32 %v2353, %v2453
      %v2475 = vadd.f32 %v2354, %v2457
      %v2476 = vadd.f32 %v2355, %v2459
      %v2477 = vadd.f32 %v2356, %v2463
      %v2478 = vadd.f32 %v2357, %v2465
      %v2479 = vadd.f32 %v2358, %v2469
      %v2480 = vadd.f32 %v2359, %v2471
      %v2481 = vld [vmem:[%s6] sm:$0xff]
      %v2482 = vld [vmem:[%s6 + $0x8] sm:$0xff]
      %v2483 = vld [vmem:[%s6 + $0x10] sm:$0xff]
      %v2484 = vld [vmem:[%s6 + $0x18] sm:$0xff]
      %2486 = vset.pattern.permute.xlu0 0
      %2487 = vperm.xlu0 %2486, %v2481
      %v2488 = vpop.permute.xlu0 %2487
      %2491 = vset.pattern.permute.xlu0 0
      %2492 = vperm.xlu0 %2491, %v2482
      %v2493 = vpop.permute.xlu0 %2492
      %2496 = vset.pattern.permute.xlu0 0
      %2497 = vperm.xlu0 %2496, %v2483
      %v2498 = vpop.permute.xlu0 %2497
      %2501 = vset.pattern.permute.xlu0 0
      %2502 = vperm.xlu0 %2501, %v2484
      %v2503 = vpop.permute.xlu0 %2502
      %v2505 = vadd.f32 %v2473, %v2488
      %v2506 = vadd.f32 %v2474, %v2488
      %v2507 = vadd.f32 %v2475, %v2493
      %v2508 = vadd.f32 %v2476, %v2493
      %v2509 = vadd.f32 %v2477, %v2498
      %v2510 = vadd.f32 %v2478, %v2498
      %v2511 = vadd.f32 %v2479, %v2503
      %v2512 = vadd.f32 %v2480, %v2503
      %vm2513 = vcmp.gt.f32.partialorder %v2505, 0.0
      %vm2514 = vcmp.gt.f32.partialorder %v2506, 0.0
      %vm2515 = vcmp.gt.f32.partialorder %v2507, 0.0
      %vm2516 = vcmp.gt.f32.partialorder %v2508, 0.0
      %vm2517 = vcmp.gt.f32.partialorder %v2509, 0.0
      %vm2518 = vcmp.gt.f32.partialorder %v2510, 0.0
      %vm2519 = vcmp.gt.f32.partialorder %v2511, 0.0
      %vm2520 = vcmp.gt.f32.partialorder %v2512, 0.0
      %v2521 = vmul.f32 %v2505, 1.442695
      %v2522 = vpow.pop %v2521
      %v2523 = vmul.f32 %v2506, 1.442695
      %v2524 = vpow.pop %v2523
      %v2525 = vmul.f32 %v2507, 1.442695
      %v2526 = vpow.pop %v2525
      %v2527 = vmul.f32 %v2508, 1.442695
      %v2528 = vpow.pop %v2527
      %v2529 = vmul.f32 %v2509, 1.442695
      %v2530 = vpow.pop %v2529
      %v2531 = vmul.f32 %v2510, 1.442695
      %v2532 = vpow.pop %v2531
      %v2533 = vmul.f32 %v2511, 1.442695
      %v2534 = vpow.pop %v2533
      %v2535 = vmul.f32 %v2512, 1.442695
      %v2536 = vpow.pop %v2535
      %v2537 = vsub.f32 %v2522, 1.0
      %v2538 = vsub.f32 %v2524, 1.0
      %v2539 = vsub.f32 %v2526, 1.0
      %v2540 = vsub.f32 %v2528, 1.0
      %v2541 = vsub.f32 %v2530, 1.0
      %v2542 = vsub.f32 %v2532, 1.0
      %v2543 = vsub.f32 %v2534, 1.0
      %v2544 = vsub.f32 %v2536, 1.0
      %v2545 = vsel %vm2513, %v2505, %v2537
      %v2546 = vsel %vm2514, %v2506, %v2538
      %v2547 = vsel %vm2515, %v2507, %v2539
      %v2548 = vsel %vm2516, %v2508, %v2540
      %v2549 = vsel %vm2517, %v2509, %v2541
      %v2550 = vsel %vm2518, %v2510, %v2542
      %v2551 = vsel %vm2519, %v2511, %v2543
      %v2552 = vsel %vm2520, %v2512, %v2544
      %v2553 = vld [vmem:[%s7] sm:$0xff]
      %v2554 = vld [vmem:[%s7 + $0x8] sm:$0xff]
      %v2555 = vld [vmem:[%s7 + $0x10] sm:$0xff]
      %v2556 = vld [vmem:[%s7 + $0x18] sm:$0xff]
      %v2557 = vld [vmem:[%s7 + $0x20] sm:$0xff]
      %v2558 = vld [vmem:[%s7 + $0x28] sm:$0xff]
      %v2559 = vld [vmem:[%s7 + $0x30] sm:$0xff]
      %v2560 = vld [vmem:[%s7 + $0x38] sm:$0xff]
      %v2561 = vld [vmem:[%s7 + $0x40] sm:$0xff]
      %v2562 = vld [vmem:[%s7 + $0x48] sm:$0xff]
      %v2563 = vld [vmem:[%s7 + $0x50] sm:$0xff]
      %v2564 = vld [vmem:[%s7 + $0x58] sm:$0xff]
      %v2565 = vld [vmem:[%s7 + $0x60] sm:$0xff]
      %v2566 = vld [vmem:[%s7 + $0x68] sm:$0xff]
      %v2567 = vld [vmem:[%s7 + $0x70] sm:$0xff]
      %v2568 = vld [vmem:[%s7 + $0x78] sm:$0xff]
      %v2569 = vld [vmem:[%s7 + $0x80] sm:$0xff]
      %v2570 = vld [vmem:[%s7 + $0x88] sm:$0xff]
      %v2571 = vld [vmem:[%s7 + $0x90] sm:$0xff]
      %v2572 = vld [vmem:[%s7 + $0x98] sm:$0xff]
      %v2573 = vld [vmem:[%s7 + $0xa0] sm:$0xff]
      %v2574 = vld [vmem:[%s7 + $0xa8] sm:$0xff]
      %v2575 = vld [vmem:[%s7 + $0xb0] sm:$0xff]
      %v2576 = vld [vmem:[%s7 + $0xb8] sm:$0xff]
      %v2577 = vld [vmem:[%s7 + $0xc0] sm:$0xff]
      %v2578 = vld [vmem:[%s7 + $0xc8] sm:$0xff]
      %v2579 = vld [vmem:[%s7 + $0xd0] sm:$0xff]
      %v2580 = vld [vmem:[%s7 + $0xd8] sm:$0xff]
      %v2581 = vld [vmem:[%s7 + $0xe0] sm:$0xff]
      %v2582 = vld [vmem:[%s7 + $0xe8] sm:$0xff]
      %v2583 = vld [vmem:[%s7 + $0xf0] sm:$0xff]
      %v2584 = vld [vmem:[%s7 + $0xf8] sm:$0xff]
      %2585 = vmatprep.subr.mxu0 0.0
      %2586 = vmatpush1.msra.mxu0 %v2553
      %2587 = vmatprep.subr.mxu0 0.0
      %2588 = vmatpush1.msra.mxu0 %v2554
      %2589 = vmatprep.subr.mxu0 0.0
      %2590 = vmatpush1.msra.mxu0 %v2555
      %2591 = vmatprep.subr.mxu0 0.0
      %2592 = vmatpush1.msra.mxu0 %v2556
      %2593 = vmatprep.subr.mxu0 0.0
      %2594 = vmatpush1.msra.mxu0 %v2557
      %2595 = vmatprep.subr.mxu0 0.0
      %2596 = vmatpush1.msra.mxu0 %v2558
      %2597 = vmatprep.subr.mxu0 0.0
      %2598 = vmatpush1.msra.mxu0 %v2559
      %2599 = vmatprep.subr.mxu0 0.0
      %2600 = vmatpush1.msra.mxu0 %v2560
      %2601 = vmatprep.subr.mxu0 0.0
      %2602 = vmatpush1.msra.mxu0 %v2561
      %2603 = vmatprep.subr.mxu0 0.0
      %2604 = vmatpush1.msra.mxu0 %v2562
      %2605 = vmatprep.subr.mxu0 0.0
      %2606 = vmatpush1.msra.mxu0 %v2563
      %2607 = vmatprep.subr.mxu0 0.0
      %2608 = vmatpush1.msra.mxu0 %v2564
      %2609 = vmatprep.subr.mxu0 0.0
      %2610 = vmatpush1.msra.mxu0 %v2565
      %2611 = vmatprep.subr.mxu0 0.0
      %2612 = vmatpush1.msra.mxu0 %v2566
      %2613 = vmatprep.subr.mxu0 0.0
      %2614 = vmatpush1.msra.mxu0 %v2567
      %2615 = vmatprep.subr.mxu0 0.0
      %2616 = vmatpush1.msra.mxu0 %v2568
      %2617 = vmatprep.subr.mxu0 0.0
      %2618 = vmatpush1.msra.mxu0 %v2569
      %2619 = vmatprep.subr.mxu0 0.0
      %2620 = vmatpush1.msra.mxu0 %v2570
      %2621 = vmatprep.subr.mxu0 0.0
      %2622 = vmatpush1.msra.mxu0 %v2571
      %2623 = vmatprep.subr.mxu0 0.0
      %2624 = vmatpush1.msra.mxu0 %v2572
      %2625 = vmatprep.subr.mxu0 0.0
      %2626 = vmatpush1.msra.mxu0 %v2573
      %2627 = vmatprep.subr.mxu0 0.0
      %2628 = vmatpush1.msra.mxu0 %v2574
      %2629 = vmatprep.subr.mxu0 0.0
      %2630 = vmatpush1.msra.mxu0 %v2575
      %2631 = vmatprep.subr.mxu0 0.0
      %2632 = vmatpush1.msra.mxu0 %v2576
      %2633 = vmatprep.subr.mxu0 0.0
      %2634 = vmatpush1.msra.mxu0 %v2577
      %2635 = vmatprep.subr.mxu0 0.0
      %2636 = vmatpush1.msra.mxu0 %v2578
      %2637 = vmatprep.subr.mxu0 0.0
      %2638 = vmatpush1.msra.mxu0 %v2579
      %2639 = vmatprep.subr.mxu0 0.0
      %2640 = vmatpush1.msra.mxu0 %v2580
      %2641 = vmatprep.subr.mxu0 0.0
      %2642 = vmatpush1.msra.mxu0 %v2581
      %2643 = vmatprep.subr.mxu0 0.0
      %2644 = vmatpush1.msra.mxu0 %v2582
      %2645 = vmatprep.subr.mxu0 0.0
      %2646 = vmatpush1.msra.mxu0 %v2583
      %2647 = vmatprep.subr.mxu0 0.0
      %2648 = vmatpush1.msra.mxu0 %v2584
      %2649 = vmatprep.mubr.f32.mxu0 %v2546
      %2650 = vmatmul.mubr.f32.gmra.mrb[0].mxu0 %v2545
      %v2651 = vpop.f32.mrb[0].mxu0
      %v2652 = vadd.f32 0.0, %v2651
      %v2653 = vpop.f32.mrb[0].mxu0
      %2654 = vmatprep.mubr.f32.mxu0 %v2548
      %2655 = vmatmul.mubr.f32.gmra.mrb[0].mxu0 %v2547
      %v2656 = vpop.f32.mrb[0].mxu0
      %v2657 = vadd.f32 0.0, %v2656
      %v2658 = vpop.f32.mrb[0].mxu0
      %2659 = vmatprep.mubr.f32.mxu0 %v2550
      %2660 = vmatmul.mubr.f32.gmra.mrb[0].mxu0 %v2549
      %v2661 = vpop.f32.mrb[0].mxu0
      %v2662 = vadd.f32 0.0, %v2661
      %v2663 = vpop.f32.mrb[0].mxu0
      %2664 = vmatprep.mubr.f32.mxu0 %v2552
      %2665 = vmatmul.mubr.f32.gmra.mrb[0].mxu0 %v2551
      %v2666 = vpop.f32.mrb[0].mxu0
      %v2667 = vadd.f32 0.0, %v2666
      %v2668 = vpop.f32.mrb[0].mxu0
      %2669 = vdwg.mxu0
      %vm2670 = vcmask 97280
      %v2671 = vsel %vm2670, %v2652, -inf
      %v2672 = vsel %vm2670, %v2657, -inf
      %v2673 = vsel %vm2670, %v2662, -inf
      %v2674 = vsel %vm2670, %v2667, -inf
      %v2675 = vmax.f32 %v2671, %v2672
      %v2676 = vmax.f32 %v2673, %v2674
      %v2677 = vmax.f32 %v2675, %v2676
      %v2678 = vrot.slane %v2677, 4
      %v2679 = vmax.f32 %v2677, %v2678
      %v2680 = vrot.slane %v2679, 2
      %v2681 = vmax.f32 %v2679, %v2680
      %v2682 = vrot.slane %v2681, 1
      %v2683 = vmax.f32 %v2681, %v2682
      %v2684 = vsub.f32 %v2652, %v2683
      %v2685 = vsub.f32 %v2657, %v2683
      %v2686 = vsub.f32 %v2662, %v2683
      %v2687 = vsub.f32 %v2667, %v2683
      %v2688 = vmul.f32 %v2684, 1.442695
      %v2689 = vpow.pop %v2688
      %v2690 = vmul.f32 %v2685, 1.442695
      %v2691 = vpow.pop %v2690
      %v2692 = vmul.f32 %v2686, 1.442695
      %v2693 = vpow.pop %v2692
      %v2694 = vmul.f32 %v2687, 1.442695
      %v2695 = vpow.pop %v2694
      %v2696 = vsel %vm2670, %v2689, 0.0
      %v2697 = vsel %vm2670, %v2691, 0.0
      %v2698 = vadd.f32 %v2696, %v2697
      %v2699 = vsel %vm2670, %v2693, 0.0
      %v2700 = vadd.f32 %v2698, %v2699
      %v2701 = vsel %vm2670, %v2695, 0.0
      %v2702 = vadd.f32 %v2700, %v2701
      %v2703 = vrot.slane %v2702, 4
      %v2704 = vadd.f32 %v2702, %v2703
      %v2705 = vrot.slane %v2704, 2
      %v2706 = vadd.f32 %v2704, %v2705
      %v2707 = vrot.slane %v2706, 1
      %v2708 = vadd.f32 %v2706, %v2707
      %v2709 = vlog2.pop %v2708
      %v2710 = vmul.f32 %v2709, 0.6931472
      %v2711 = vsub.f32 %v2684, %v2710
      %v2712 = vsub.f32 %v2685, %v2710
      %v2713 = vsub.f32 %v2686, %v2710
      %v2714 = vsub.f32 %v2687, %v2710
      %2715 = vst.msk [vmem:[%s307] sm:$0xff] %vm2670, %v2711
      %2716 = vst.msk [vmem:[%s307 + $0x8] sm:$0xff] %vm2670, %v2712
      %2717 = vst.msk [vmem:[%s307 + $0x10] sm:$0xff] %vm2670, %v2713
      %2718 = vst.msk [vmem:[%s307 + $0x18] sm:$0xff] %vm2670, %v2714
      %p2719 = scmp.lt.s32.totalorder %s19, 1
      %s2720 = scalar_select %p2719, %s19, 1
      %s2721 = smul.addr %s2720, 4
      %s2722 = smul.addr %s2721, 8
      %s2723 = scalar_lea.vmem %s8, %s2722
      // Predicated region
      $region53: #{tpu_custom_call.1} parent=51 // pred_check
        %p2724 = pneg %p210
      $region54: #{tpu_custom_call.1} parent=51 // pred_check_branch
        %2726 = sbr.rel (%p2724) target = $region56
      $region55: #{tpu_custom_call.1} parent=51 // pred_region
        _
      $region56: #{tpu_custom_call.1} parent=51 // pred_fallthru
        _
    $region52: #{tpu_custom_call.1} parent=5 // pred_fallthru
      _
    %p2727 = scmp.le.s32.totalorder 2, %s14
    // Predicated region
    $region57: #{tpu_custom_call.1} parent=5 // pred_check
      %p2728 = pneg %p2727
    $region58: #{tpu_custom_call.1} parent=5 // pred_check_branch
      %2730 = sbr.rel (%p2728) target = $region60
    $region59: #{tpu_custom_call.1} parent=5 // pred_region
      %s2731 = ssub.s32 %s14, 2
      // Predicated region
      $region61: #{tpu_custom_call.1} parent=59 // pred_check
        %p2732 = pneg %p216
      $region62: #{tpu_custom_call.1} parent=59 // pred_check_branch
        %2734 = sbr.rel (%p2732) target = $region64
      $region63: #{tpu_custom_call.1} parent=59 // pred_region
        %p2735 = scmp.lt.s32.totalorder %s20, 1
        %s2736 = scalar_select %p2735, %s20, 1
        %s2737 = smul.addr %s2736, 4
        %s2738 = smul.addr %s2737, 8
        %s2739 = scalar_lea.vmem %s8, %s2738
      $region64: #{tpu_custom_call.1} parent=59 // pred_fallthru
        _
    $region60: #{tpu_custom_call.1} parent=5 // pred_fallthru
      _
  $region6: #{tpu_custom_call.1} parent=0 // loop_footer
    %s18 = sadd.s32 1, %s14
  $region7: #{tpu_custom_call.1} parent=0 // loop_footer_branch
    %13 = sbr.rel target = $region3
  $region8: #{tpu_custom_call.1} parent=0 // loop_exit
    _

</llo_original>
